<compile_context>
chip_gen: v7x
topology: tpu7x:2x2x1
jax: 0.10.0
libtpu: 0.0.40
codegen_flags: <defaults>
</compile_context>

<pallas_src>
import functools

import jax
import jax.numpy as jnp
from jax.experimental import pallas as pl
from jax.experimental.pallas import tpu as pltpu


_TB_CAP = 4096                      # max batch-tile size (samples per grid step)
_VMEM_LIMIT = 48 * 1024 * 1024      # fits v5e/v6e (128 MiB) and v7x (64 MiB)


def _round_up(x, m):
    return (x + m - 1) // m * m


def _graphlet_dnn_kernel(x_ref, w1_ref, b1_ref, w2_ref, b2_ref, wc_ref,
                         bc_col_ref, bc_row_ref, labels_ref,
                         h1_ref, h2_ref, logits_ref, preds_ref, loss_ref):
    """Fused MLP forward + argmax + masked per-sample cross-entropy.

    Compute is lane-dense (features on sublanes, batch on lanes); h1/h2/logits
    are stored in the module's (batch, features) layout.

      x_ref:        (TB, in_dim)  natural layout      w*_ref: (out, in)
      b1/b2/bc_col: (out, 1)      bc_row: (1, NL)     labels: (1, TB) int32
      h1/h2:        (TB, H)       logits: (TB, NL)
      preds/loss:   (1, TB)
    """
    x = x_ref[...]                                                   # (TB, in)

    # fc1 -> tanh.  Contract x's feature (last) dim against w1's feature dim
    # (trans-RHS matmul, same pattern as q @ k.T) -> lane-dense (H1, TB).
    a1 = jax.lax.dot_general(w1_ref[...], x, (((1,), (1,)), ((), ())),
                             preferred_element_type=jnp.float32)
    h1 = jnp.tanh(a1 + b1_ref[...])                                  # (H1, TB)
    # dropout(p=0) == identity.
    # TODO(synk): stochastic dropout would use pltpu.prng_seed/prng_random_bits.

    # fc2 -> tanh (dropout identity).
    h2 = jnp.tanh(jnp.dot(w2_ref[...], h1,
                          preferred_element_type=jnp.float32) + b2_ref[...])

    # classifier, lane-dense (used for argmax + CE below).
    logits = (jnp.dot(wc_ref[...], h2, preferred_element_type=jnp.float32)
              + bc_col_ref[...])                                     # (NL, TB)

    # ---- stores in the module's (batch, features) layout ----
    h1_ref[...] = h1.T.astype(h1_ref.dtype)            # XLU transpose (idle slot)
    h2_t = h2.T                                        # (TB, H2)
    h2_ref[...] = h2_t.astype(h2_ref.dtype)
    # logits in (TB, NL): second tiny MXU pass on the transposed h2 instead of
    # transposing a 4-sublane array.
    logits_bt = jax.lax.dot_general(h2_t, wc_ref[...], (((1,), (1,)), ((), ())),
                                    preferred_element_type=jnp.float32)
    logits_ref[...] = (logits_bt + bc_row_ref[...]).astype(logits_ref.dtype)

    # ---- argmax + masked CE on the lane-dense logits ----
    nl, tb = logits.shape
    row = jax.lax.broadcasted_iota(jnp.int32, (nl, tb), 0)

    maxv = jnp.max(logits, axis=0, keepdims=True)                    # (1, TB)
    preds_ref[...] = jnp.min(jnp.where(logits == maxv, row, jnp.int32(nl)),
                             axis=0, keepdims=True)                  # (1, TB)

    labels = labels_ref[...]                                         # (1, TB)
    valid = labels != -1
    safe = jnp.where(valid, labels, 0)
    lse = maxv + jnp.log(jnp.sum(jnp.exp(logits - maxv),
                                 axis=0, keepdims=True))             # (1, TB)
    picked = jnp.sum(jnp.where(row == safe, logits, 0.0),
                     axis=0, keepdims=True)                          # (1, TB)
    loss_ref[...] = jnp.where(valid, lse - picked, 0.0).astype(loss_ref.dtype)


@functools.partial(jax.jit, static_argnames=("block_batch",))
def graphlet_dnn_forward(inputs, labels, w1, b1, w2, b2, wc, bc, *,
                         block_batch=None):
    """Runs the fused kernel.

    Args (PyTorch layout):
      inputs: (B, in_dim) f32      labels: (B,) int
      w1: (H1, in_dim)  b1: (H1,)  w2: (H2, H1)  b2: (H2,)
      wc: (NL, H2)      bc: (NL,)
    Returns (loss, preds, all_hidden_states) like the PyTorch module with
    flag='Train'; all_hidden_states = (inputs, fc1_out, fc2_out, logits).
    """
    batch, in_dim = inputs.shape
    h1_dim = w1.shape[0]
    h2_dim = w2.shape[0]
    num_labels = wc.shape[0]

    # Batch tile: a single full-batch tile when it fits the cap; otherwise a
    # multiple of 128 (the (1, tb) lane-row blocks require it) streamed over a
    # 1-D grid.  Partial last blocks are clipped by Pallas, so no padding or
    # output-slicing round trips are introduced.
    if block_batch is None:
        tb = min(batch, _TB_CAP)
    else:
        tb = min(int(block_batch), batch)
    if tb < batch:
        tb = max(128, (tb // 128) * 128)
        if tb >= batch:
            tb = batch
    num_tiles = pl.cdiv(batch, tb)

    x = inputs.astype(jnp.float32)                          # natural (B, in)
    labels_row = labels.astype(jnp.int32).reshape(1, batch)  # reshape, no copy
    b1_col = b1.reshape(h1_dim, 1).astype(jnp.float32)
    b2_col = b2.reshape(h2_dim, 1).astype(jnp.float32)
    bc_col = bc.reshape(num_labels, 1).astype(jnp.float32)
    bc_row = bc.reshape(1, num_labels).astype(jnp.float32)

    out_shape = (
        jax.ShapeDtypeStruct((batch, h1_dim), jnp.float32),      # fc1 hidden
        jax.ShapeDtypeStruct((batch, h2_dim), jnp.float32),      # fc2 hidden
        jax.ShapeDtypeStruct((batch, num_labels), jnp.float32),  # logits
        jax.ShapeDtypeStruct((1, batch), jnp.int32),             # preds
        jax.ShapeDtypeStruct((1, batch), jnp.float32),           # per-sample CE
    )

    grid_spec = pltpu.PrefetchScalarGridSpec(
        num_scalar_prefetch=0,
        grid=(num_tiles,),
        in_specs=[
            pl.BlockSpec((tb, in_dim), lambda i: (i, 0)),           # x (streamed)
            # Resident parameters: constant index_map -> fetched once.
            pl.BlockSpec((h1_dim, in_dim), lambda i: (0, 0)),       # w1
            pl.BlockSpec((h1_dim, 1), lambda i: (0, 0)),            # b1
            pl.BlockSpec((h2_dim, h1_dim), lambda i: (0, 0)),       # w2
            pl.BlockSpec((h2_dim, 1), lambda i: (0, 0)),            # b2
            pl.BlockSpec((num_labels, h2_dim), lambda i: (0, 0)),   # wc
            pl.BlockSpec((num_labels, 1), lambda i: (0, 0)),        # bc (col)
            pl.BlockSpec((1, num_labels), lambda i: (0, 0)),        # bc (row)
            pl.BlockSpec((1, tb), lambda i: (0, i)),                # labels
        ],
        out_specs=[
            pl.BlockSpec((tb, h1_dim), lambda i: (i, 0)),
            pl.BlockSpec((tb, h2_dim), lambda i: (i, 0)),
            pl.BlockSpec((tb, num_labels), lambda i: (i, 0)),
            pl.BlockSpec((1, tb), lambda i: (0, i)),
            pl.BlockSpec((1, tb), lambda i: (0, i)),
        ],
    )

    h1, h2, logits, preds_row, loss_row = pl.pallas_call(
        _graphlet_dnn_kernel,
        out_shape=out_shape,
        grid_spec=grid_spec,
        compiler_params=pltpu.CompilerParams(
            # Batch tiles are independent -> "parallel".  On v7x, verify in
            # the profile that both TensorCores are busy; if not, switch to
            # pltpu.CORE_PARALLEL / an explicit 2-wide leading grid axis.
            dimension_semantics=("parallel",),
            vmem_limit_bytes=_VMEM_LIMIT,
        ),
    )(x, w1.astype(jnp.float32), b1_col, w2.astype(jnp.float32), b2_col,
      wc.astype(jnp.float32), bc_col, bc_row, labels_row)

    preds = preds_row[0]              # (batch,) int32

    # CE mean over valid samples.  Plain sum/count so an all-ignored batch
    # returns NaN, matching torch CrossEntropyLoss(reduction='mean').
    count = jnp.sum((labels.astype(jnp.int32) != -1).astype(jnp.float32))
    loss = jnp.sum(loss_row[0]) / count

    all_hidden_states = (inputs, h1, h2, logits)
    return loss, preds, all_hidden_states


def _reference_forward(inputs, labels, w1, b1, w2, b2, wc, bc):
    """Pure-JAX reference of the PyTorch forward (dropout p=0, flag='Train')."""
    h1 = jnp.tanh(inputs @ w1.T + b1)
    h2 = jnp.tanh(h1 @ w2.T + b2)
    logits = h2 @ wc.T + bc
    preds = jnp.argmax(logits, axis=-1).astype(jnp.int32)
    lse = jax.scipy.special.logsumexp(logits, axis=-1)
    valid = labels != -1
    safe = jnp.where(valid, labels, 0)
    picked = jnp.take_along_axis(logits, safe[:, None], axis=-1)[:, 0]
    per = jnp.where(valid, lse - picked, 0.0)
    loss = jnp.sum(per) / jnp.sum(valid.astype(jnp.float32))
    return loss, preds, (inputs, h1, h2, logits)


if __name__ == "__main__":
    # params = {'input_dim': 16, 'fc1_hidden_dim': 32, 'fc2_hidden_dim': 32,
    #           'num_labels': 4, 'dropout': 0.0}
    batch, input_dim, fc1_dim, fc2_dim, num_labels = 256, 16, 32, 32, 4

    key = jax.random.PRNGKey(0)
    k_x, k_w1, k_b1, k_w2, k_b2, k_wc, k_bc, k_y = jax.random.split(key, 8)

    inputs = jax.random.normal(k_x, (batch, input_dim), dtype=jnp.float32)

    # Deterministic "nn.Linear"-like init; weights kept in PyTorch (out, in).
    w1 = jax.random.uniform(k_w1, (fc1_dim, input_dim), jnp.float32,
                            -1.0 / input_dim ** 0.5, 1.0 / input_dim ** 0.5)
    b1 = jax.random.uniform(k_b1, (fc1_dim,), jnp.float32,
                            -1.0 / input_dim ** 0.5, 1.0 / input_dim ** 0.5)
    w2 = jax.random.uniform(k_w2, (fc2_dim, fc1_dim), jnp.float32,
                            -1.0 / fc1_dim ** 0.5, 1.0 / fc1_dim ** 0.5)
    b2 = jax.random.uniform(k_b2, (fc2_dim,), jnp.float32,
                            -1.0 / fc1_dim ** 0.5, 1.0 / fc1_dim ** 0.5)
    wc = jax.random.uniform(k_wc, (num_labels, fc2_dim), jnp.float32,
                            -1.0 / fc2_dim ** 0.5, 1.0 / fc2_dim ** 0.5)
    bc = jax.random.uniform(k_bc, (num_labels,), jnp.float32,
                            -1.0 / fc2_dim ** 0.5, 1.0 / fc2_dim ** 0.5)

    labels = jax.random.randint(k_y, (batch,), 0, num_labels, dtype=jnp.int32)
    labels = labels.at[0].set(-1)   # exercise ignore_index=-1

    # Multi-tile pipelined path (two 128-sample batch tiles).
    out_tiled = graphlet_dnn_forward(inputs, labels, w1, b1, w2, b2, wc, bc,
                                     block_batch=128)
    # Default path (single full-batch tile, weights resident).
    out_default = graphlet_dnn_forward(inputs, labels, w1, b1, w2, b2, wc, bc)
    jax.block_until_ready((out_tiled, out_default))

    ref_loss, ref_preds, ref_hiddens = _reference_forward(
        inputs, labels, w1, b1, w2, b2, wc, bc)

    for loss, preds, hiddens in (out_tiled, out_default):
        assert jnp.allclose(loss, ref_loss, atol=2e-5, rtol=2e-5), (loss, ref_loss)
        assert jnp.array_equal(preds, ref_preds), (preds, ref_preds)
        for got, want in zip(hiddens[1:], ref_hiddens[1:]):
            assert jnp.allclose(got, want, atol=2e-5, rtol=2e-5)

    print("KERNEL_OK")
</pallas_src>

<mosaic_0001>
module attributes {stable_mosaic.version = 11 : i64} {
  func.func @_graphlet_dnn_kernel(%arg0: i32, %arg1: memref<128x16xf32, #tpu.memory_space<vmem>>, %arg2: memref<32x16xf32, #tpu.memory_space<vmem>>, %arg3: memref<32x1xf32, #tpu.memory_space<vmem>>, %arg4: memref<32x32xf32, #tpu.memory_space<vmem>>, %arg5: memref<32x1xf32, #tpu.memory_space<vmem>>, %arg6: memref<4x32xf32, #tpu.memory_space<vmem>>, %arg7: memref<4x1xf32, #tpu.memory_space<vmem>>, %arg8: memref<1x4xf32, #tpu.memory_space<vmem>>, %arg9: memref<1x128xi32, #tpu.memory_space<vmem>>, %arg10: memref<128x32xf32, #tpu.memory_space<vmem>>, %arg11: memref<128x32xf32, #tpu.memory_space<vmem>>, %arg12: memref<128x4xf32, #tpu.memory_space<vmem>>, %arg13: memref<1x128xi32, #tpu.memory_space<vmem>>, %arg14: memref<1x128xf32, #tpu.memory_space<vmem>>) attributes {dimension_semantics = [#tpu.dimension_semantics<parallel>], iteration_bounds = array<i64: 2>, scalar_prefetch = 0 : i64, scratch_operands = 0 : i64, tpu.core_type = #tpu.core_type<tc>, window_params = [{transform_indices = @transform_0, window_bounds = array<i64: 128, 16>}, {pipeline_mode = #tpu.pipeline_mode<synchronous>, transform_indices = @transform_1, window_bounds = array<i64: 32, 16>}, {pipeline_mode = #tpu.pipeline_mode<synchronous>, transform_indices = @transform_2, window_bounds = array<i64: 32, 1>}, {pipeline_mode = #tpu.pipeline_mode<synchronous>, transform_indices = @transform_3, window_bounds = array<i64: 32, 32>}, {pipeline_mode = #tpu.pipeline_mode<synchronous>, transform_indices = @transform_4, window_bounds = array<i64: 32, 1>}, {pipeline_mode = #tpu.pipeline_mode<synchronous>, transform_indices = @transform_5, window_bounds = array<i64: 4, 32>}, {pipeline_mode = #tpu.pipeline_mode<synchronous>, transform_indices = @transform_6, window_bounds = array<i64: 4, 1>}, {pipeline_mode = #tpu.pipeline_mode<synchronous>, transform_indices = @transform_7, window_bounds = array<i64: 1, 4>}, {transform_indices = @transform_8, window_bounds = array<i64: 1, 128>}, {transform_indices = @transform_9, window_bounds = array<i64: 128, 32>}, {transform_indices = @transform_10, window_bounds = array<i64: 128, 32>}, {transform_indices = @transform_11, window_bounds = array<i64: 128, 4>}, {transform_indices = @transform_12, window_bounds = array<i64: 1, 128>}, {transform_indices = @transform_13, window_bounds = array<i64: 1, 128>}]} {
    %c0 = arith.constant 0 : index
    %c0_0 = arith.constant 0 : index
    %0 = vector.load %arg1[%c0, %c0_0] : memref<128x16xf32, #tpu.memory_space<vmem>>, vector<128x16xf32>
    %c0_1 = arith.constant 0 : index
    %c0_2 = arith.constant 0 : index
    %1 = vector.load %arg2[%c0_1, %c0_2] : memref<32x16xf32, #tpu.memory_space<vmem>>, vector<32x16xf32>
    %cst = arith.constant dense<0.000000e+00> : vector<32x128xf32>
    %2 = tpu.matmul %1, %0, %cst {dimension_numbers = #tpu.dot_dimension_numbers<[1], [1], [0], [0], [0, 0, 1, 0], [], []>} : vector<32x16xf32>, vector<128x16xf32>, vector<32x128xf32> -> vector<32x128xf32>
    %c0_3 = arith.constant 0 : index
    %c0_4 = arith.constant 0 : index
    %3 = vector.load %arg3[%c0_3, %c0_4] : memref<32x1xf32, #tpu.memory_space<vmem>>, vector<32x1xf32>
    %4 = vector.broadcast %3 : vector<32x1xf32> to vector<32x128xf32>
    %5 = arith.addf %2, %4 : vector<32x128xf32>
    %6 = math.tanh %5 : vector<32x128xf32>
    %c0_5 = arith.constant 0 : index
    %c0_6 = arith.constant 0 : index
    %7 = vector.load %arg4[%c0_5, %c0_6] : memref<32x32xf32, #tpu.memory_space<vmem>>, vector<32x32xf32>
    %cst_7 = arith.constant dense<0.000000e+00> : vector<32x128xf32>
    %8 = tpu.matmul %7, %6, %cst_7 {dimension_numbers = #tpu.dot_dimension_numbers<[1], [0], [0], [1], [0, 0, 1, 1], [], []>} : vector<32x32xf32>, vector<32x128xf32>, vector<32x128xf32> -> vector<32x128xf32>
    %c0_8 = arith.constant 0 : index
    %c0_9 = arith.constant 0 : index
    %9 = vector.load %arg5[%c0_8, %c0_9] : memref<32x1xf32, #tpu.memory_space<vmem>>, vector<32x1xf32>
    %10 = vector.broadcast %9 : vector<32x1xf32> to vector<32x128xf32>
    %11 = arith.addf %8, %10 : vector<32x128xf32>
    %12 = math.tanh %11 : vector<32x128xf32>
    %c0_10 = arith.constant 0 : index
    %c0_11 = arith.constant 0 : index
    %13 = vector.load %arg6[%c0_10, %c0_11] : memref<4x32xf32, #tpu.memory_space<vmem>>, vector<4x32xf32>
    %cst_12 = arith.constant dense<0.000000e+00> : vector<4x128xf32>
    %14 = tpu.matmul %13, %12, %cst_12 {dimension_numbers = #tpu.dot_dimension_numbers<[1], [0], [0], [1], [0, 0, 1, 1], [], []>} : vector<4x32xf32>, vector<32x128xf32>, vector<4x128xf32> -> vector<4x128xf32>
    %c0_13 = arith.constant 0 : index
    %c0_14 = arith.constant 0 : index
    %15 = vector.load %arg7[%c0_13, %c0_14] : memref<4x1xf32, #tpu.memory_space<vmem>>, vector<4x1xf32>
    %16 = vector.broadcast %15 : vector<4x1xf32> to vector<4x128xf32>
    %17 = arith.addf %14, %16 : vector<4x128xf32>
    %18 = tpu.transpose %6, [1, 0] : vector<32x128xf32> -> vector<128x32xf32>
    %c0_15 = arith.constant 0 : index
    %c0_16 = arith.constant 0 : index
    %19 = vector.load %arg10[%c0_15, %c0_16] : memref<128x32xf32, #tpu.memory_space<vmem>>, vector<128x32xf32>
    tpu.vector_store %arg10[%c0_15, %c0_16], %18 {strides = array<i32>} : memref<128x32xf32, #tpu.memory_space<vmem>>, vector<128x32xf32>,
    %20 = tpu.transpose %12, [1, 0] : vector<32x128xf32> -> vector<128x32xf32>
    %c0_17 = arith.constant 0 : index
    %c0_18 = arith.constant 0 : index
    %21 = vector.load %arg11[%c0_17, %c0_18] : memref<128x32xf32, #tpu.memory_space<vmem>>, vector<128x32xf32>
    tpu.vector_store %arg11[%c0_17, %c0_18], %20 {strides = array<i32>} : memref<128x32xf32, #tpu.memory_space<vmem>>, vector<128x32xf32>,
    %c0_19 = arith.constant 0 : index
    %c0_20 = arith.constant 0 : index
    %22 = vector.load %arg6[%c0_19, %c0_20] : memref<4x32xf32, #tpu.memory_space<vmem>>, vector<4x32xf32>
    %cst_21 = arith.constant dense<0.000000e+00> : vector<128x4xf32>
    %23 = tpu.matmul %20, %22, %cst_21 {dimension_numbers = #tpu.dot_dimension_numbers<[1], [1], [0], [0], [0, 0, 1, 0], [], []>} : vector<128x32xf32>, vector<4x32xf32>, vector<128x4xf32> -> vector<128x4xf32>
    %c0_22 = arith.constant 0 : index
    %c0_23 = arith.constant 0 : index
    %24 = vector.load %arg8[%c0_22, %c0_23] : memref<1x4xf32, #tpu.memory_space<vmem>>, vector<1x4xf32>
    %25 = vector.broadcast %24 : vector<1x4xf32> to vector<128x4xf32>
    %26 = arith.addf %23, %25 : vector<128x4xf32>
    %c0_24 = arith.constant 0 : index
    %c0_25 = arith.constant 0 : index
    %27 = vector.load %arg12[%c0_24, %c0_25] : memref<128x4xf32, #tpu.memory_space<vmem>>, vector<128x4xf32>
    tpu.vector_store %arg12[%c0_24, %c0_25], %26 {strides = array<i32>} : memref<128x4xf32, #tpu.memory_space<vmem>>, vector<128x4xf32>,
    %28 = tpu.iota {dimensions = array<i32: 0>} : vector<4x128xi32>
    %cst_26 = arith.constant dense<0xFF800000> : vector<128xf32>
    %29 = vector.multi_reduction <maximumf>, %17, %cst_26 [0] : vector<4x128xf32> to vector<128xf32>
    %30 = vector.shape_cast %29 : vector<128xf32> to vector<1x128xf32>
    %31 = vector.broadcast %30 : vector<1x128xf32> to vector<4x128xf32>
    %32 = arith.cmpf oeq, %17, %31 : vector<4x128xf32>
    %c4_i32 = arith.constant 4 : i32
    %33 = vector.broadcast %c4_i32 : i32 to vector<4x128xi32>
    %34 = arith.select %32, %28, %33 : vector<4x128xi1>, vector<4x128xi32>
    %cst_27 = arith.constant dense<2147483647> : vector<128xi32>
    %35 = vector.multi_reduction <minsi>, %34, %cst_27 [0] : vector<4x128xi32> to vector<128xi32>
    %36 = vector.shape_cast %35 : vector<128xi32> to vector<1x128xi32>
    %c0_28 = arith.constant 0 : index
    %c0_29 = arith.constant 0 : index
    %37 = vector.load %arg13[%c0_28, %c0_29] : memref<1x128xi32, #tpu.memory_space<vmem>>, vector<1x128xi32>
    tpu.vector_store %arg13[%c0_28, %c0_29], %36 {strides = array<i32>} : memref<1x128xi32, #tpu.memory_space<vmem>>, vector<1x128xi32>,
    %c0_30 = arith.constant 0 : index
    %c0_31 = arith.constant 0 : index
    %38 = vector.load %arg9[%c0_30, %c0_31] : memref<1x128xi32, #tpu.memory_space<vmem>>, vector<1x128xi32>
    %c-1_i32 = arith.constant -1 : i32
    %39 = vector.broadcast %c-1_i32 : i32 to vector<1x128xi32>
    %40 = arith.cmpi ne, %38, %39 : vector<1x128xi32>
    %c0_i32 = arith.constant 0 : i32
    %41 = vector.broadcast %c0_i32 : i32 to vector<1x128xi32>
    %42 = arith.select %40, %38, %41 : vector<1x128xi1>, vector<1x128xi32>
    %43 = vector.broadcast %30 : vector<1x128xf32> to vector<4x128xf32>
    %44 = arith.subf %17, %43 : vector<4x128xf32>
    %45 = math.exp %44 : vector<4x128xf32>
    %cst_32 = arith.constant dense<0.000000e+00> : vector<128xf32>
    %46 = vector.multi_reduction <add>, %45, %cst_32 [0] : vector<4x128xf32> to vector<128xf32>
    %47 = vector.shape_cast %46 : vector<128xf32> to vector<1x128xf32>
    %48 = math.log %47 : vector<1x128xf32>
    %49 = arith.addf %30, %48 : vector<1x128xf32>
    %50 = vector.broadcast %42 : vector<1x128xi32> to vector<4x128xi32>
    %51 = arith.cmpi eq, %28, %50 : vector<4x128xi32>
    %cst_33 = arith.constant 0.000000e+00 : f32
    %52 = vector.broadcast %cst_33 : f32 to vector<4x128xf32>
    %53 = arith.select %51, %17, %52 : vector<4x128xi1>, vector<4x128xf32>
    %cst_34 = arith.constant dense<0.000000e+00> : vector<128xf32>
    %54 = vector.multi_reduction <add>, %53, %cst_34 [0] : vector<4x128xf32> to vector<128xf32>
    %55 = vector.shape_cast %54 : vector<128xf32> to vector<1x128xf32>
    %56 = arith.subf %49, %55 : vector<1x128xf32>
    %cst_35 = arith.constant 0.000000e+00 : f32
    %57 = vector.broadcast %cst_35 : f32 to vector<1x128xf32>
    %58 = arith.select %40, %56, %57 : vector<1x128xi1>, vector<1x128xf32>
    %c0_36 = arith.constant 0 : index
    %c0_37 = arith.constant 0 : index
    %59 = vector.load %arg14[%c0_36, %c0_37] : memref<1x128xf32, #tpu.memory_space<vmem>>, vector<1x128xf32>
    tpu.vector_store %arg14[%c0_36, %c0_37], %58 {strides = array<i32>} : memref<1x128xf32, #tpu.memory_space<vmem>>, vector<1x128xf32>,
    return
  }
  func.func @transform_0(%arg0: i32) -> (i32, i32) {
    %c0_i32 = arith.constant 0 : i32
    %c0_i32_0 = arith.constant 0 : i32
    return %arg0, %c0_i32 : i32, i32
  }
  func.func @transform_1(%arg0: i32) -> (i32, i32) {
    %c0_i32 = arith.constant 0 : i32
    %c0_i32_0 = arith.constant 0 : i32
    %c0_i32_1 = arith.constant 0 : i32
    return %c0_i32, %c0_i32_0 : i32, i32
  }
  func.func @transform_2(%arg0: i32) -> (i32, i32) {
    %c0_i32 = arith.constant 0 : i32
    %c0_i32_0 = arith.constant 0 : i32
    %c0_i32_1 = arith.constant 0 : i32
    return %c0_i32, %c0_i32_0 : i32, i32
  }
  func.func @transform_3(%arg0: i32) -> (i32, i32) {
    %c0_i32 = arith.constant 0 : i32
    %c0_i32_0 = arith.constant 0 : i32
    %c0_i32_1 = arith.constant 0 : i32
    return %c0_i32, %c0_i32_0 : i32, i32
  }
  func.func @transform_4(%arg0: i32) -> (i32, i32) {
    %c0_i32 = arith.constant 0 : i32
    %c0_i32_0 = arith.constant 0 : i32
    %c0_i32_1 = arith.constant 0 : i32
    return %c0_i32, %c0_i32_0 : i32, i32
  }
  func.func @transform_5(%arg0: i32) -> (i32, i32) {
    %c0_i32 = arith.constant 0 : i32
    %c0_i32_0 = arith.constant 0 : i32
    %c0_i32_1 = arith.constant 0 : i32
    return %c0_i32, %c0_i32_0 : i32, i32
  }
  func.func @transform_6(%arg0: i32) -> (i32, i32) {
    %c0_i32 = arith.constant 0 : i32
    %c0_i32_0 = arith.constant 0 : i32
    %c0_i32_1 = arith.constant 0 : i32
    return %c0_i32, %c0_i32_0 : i32, i32
  }
  func.func @transform_7(%arg0: i32) -> (i32, i32) {
    %c0_i32 = arith.constant 0 : i32
    %c0_i32_0 = arith.constant 0 : i32
    %c0_i32_1 = arith.constant 0 : i32
    return %c0_i32, %c0_i32_0 : i32, i32
  }
  func.func @transform_8(%arg0: i32) -> (i32, i32) {
    %c0_i32 = arith.constant 0 : i32
    %c0_i32_0 = arith.constant 0 : i32
    return %c0_i32, %arg0 : i32, i32
  }
  func.func @transform_9(%arg0: i32) -> (i32, i32) {
    %c0_i32 = arith.constant 0 : i32
    %c0_i32_0 = arith.constant 0 : i32
    return %arg0, %c0_i32 : i32, i32
  }
  func.func @transform_10(%arg0: i32) -> (i32, i32) {
    %c0_i32 = arith.constant 0 : i32
    %c0_i32_0 = arith.constant 0 : i32
    return %arg0, %c0_i32 : i32, i32
  }
  func.func @transform_11(%arg0: i32) -> (i32, i32) {
    %c0_i32 = arith.constant 0 : i32
    %c0_i32_0 = arith.constant 0 : i32
    return %arg0, %c0_i32 : i32, i32
  }
  func.func @transform_12(%arg0: i32) -> (i32, i32) {
    %c0_i32 = arith.constant 0 : i32
    %c0_i32_0 = arith.constant 0 : i32
    return %c0_i32, %arg0 : i32, i32
  }
  func.func @transform_13(%arg0: i32) -> (i32, i32) {
    %c0_i32 = arith.constant 0 : i32
    %c0_i32_0 = arith.constant 0 : i32
    return %c0_i32, %arg0 : i32, i32
  }
}

</mosaic_0001>

<llo_original>
// kernel: graphlet_dnn_forward.1
$region0: #{graphlet_dnn_forward.1}
  #allocation0 [shape = 'u32[]', space=smem, size = 0x4, offset = 0x4, fixed_abs, tag = 'smem constant byte address 0x4 - core index']
  #allocation1 [shape = 'u32[144,128]{1,0:T(1,128)}', space=vmem, size = 0x12000, scoped, tag = 'internal scratch']
  %s0 = inlined_call_operand.vmem [shape: f32[256,16], index: 0, kind: input, shape index: {}]
  %s1 = inlined_call_operand.vmem [shape: f32[32,16], index: 1, kind: input, shape index: {}]
  %s2 = inlined_call_operand.vmem [shape: f32[32,1], index: 2, kind: input, shape index: {}]
  %s3 = inlined_call_operand.vmem [shape: f32[32,32], index: 3, kind: input, shape index: {}]
  %s4 = inlined_call_operand.vmem [shape: f32[32,1], index: 4, kind: input, shape index: {}]
  %s5 = inlined_call_operand.vmem [shape: f32[4,32], index: 5, kind: input, shape index: {}]
  %s6 = inlined_call_operand.vmem [shape: f32[4,1], index: 6, kind: input, shape index: {}]
  %s7 = inlined_call_operand.vmem [shape: f32[1,4], index: 7, kind: input, shape index: {}]
  %s8 = inlined_call_operand.vmem [shape: s32[1,256], index: 8, kind: input, shape index: {}]
  %s9 = inlined_call_operand.vmem [shape: f32[256,32], index: 9, kind: output, shape index: {0}]
  %s10 = inlined_call_operand.vmem [shape: f32[256,32], index: 10, kind: output, shape index: {1}]
  %s11 = inlined_call_operand.vmem [shape: f32[256,4], index: 11, kind: output, shape index: {2}]
  %s12 = inlined_call_operand.hbm [shape: s32[1,256], index: 12, kind: output, shape index: {3}]
  %s13 = inlined_call_operand.vmem [shape: f32[1,256], index: 13, kind: output, shape index: {4}]
  %14 = xla_tuple %s9, %s10, %s11, %s12, %s13
  %s15 = sld [smem:[#allocation0]]
  $region101: #{graphlet_dnn_forward.1} parent=0
    _
  %s17 = ssub.s32 1, %s15
  %s18 = scalar_select 0, %s17, %s15
  $region1: #{graphlet_dnn_forward.1} parent=0
    #allocation2 [shape = 'u8[1024]{0}', space=vmem, size = 0x400, scoped, tag = 'output window, operand 3']
    #allocation3 [shape = 's32[2]{0}', space=sflag, size = 0x8, scoped, tag = 'scoped memory for graphlet_dnn_forward.1']
    %19 = vsyncpa [#allocation3], 0
    %s20 = scalar_lea.sflag [#allocation3], 1
    %21 = vsyncpa %s20, 0
    loop: start=0, step=1, limit=4
    $region2: #{graphlet_dnn_forward.1} parent=1 // loop_pre_header
      _
    $region3: #{graphlet_dnn_forward.1} parent=1 // loop_header
      %s23 = sphi 0, %s27
      %p24 = scmp.ge.s32.totalorder %s23, 4
      %s33 = sphi 0, %s35
      %s36 = sphi 0, %s33
      %s37 = sphi 0, %s36
      %s53 = sphi 0, %s37
      %s57 = sphi 0, %s57
      %s59 = sphi 0, %s57
      %s60 = sphi 0, %s59
      %s74 = sphi 0, %s60
      %s78 = sphi 0, %s78
      %s80 = sphi 0, %s78
      %s81 = sphi 0, %s80
      %s95 = sphi 0, %s81
      %s99 = sphi 0, %s99
      %s101 = sphi 0, %s99
      %s102 = sphi 0, %s101
      %s116 = sphi 0, %s102
      %s120 = sphi 0, %s120
      %s122 = sphi 0, %s120
      %s123 = sphi 0, %s122
      %s137 = sphi 0, %s123
      %s141 = sphi 0, %s141
      %s143 = sphi 0, %s141
      %s144 = sphi 0, %s143
      %s158 = sphi 0, %s144
      %s162 = sphi 0, %s162
      %s164 = sphi 0, %s162
      %s165 = sphi 0, %s164
      %s179 = sphi 0, %s165
      %s183 = sphi 0, %s183
      %s185 = sphi 0, %s183
      %s186 = sphi 0, %s185
      %s200 = sphi 0, %s186
      %s206 = sphi 0, %s208
      %s209 = sphi 0, %s206
      %s210 = sphi 0, %s209
      %s226 = sphi 0, %s210
      %s232 = sphi 0, %s234
      %s235 = sphi 0, %s232
      %s236 = sphi 0, %s235
      %s252 = sphi 0, %s236
      %s258 = sphi 0, %s260
      %s261 = sphi 0, %s258
      %s262 = sphi 0, %s261
      %s278 = sphi 0, %s262
      %s284 = sphi 0, %s286
      %s287 = sphi 0, %s284
      %s288 = sphi 0, %s287
      %s304 = sphi 0, %s288
      %s310 = sphi 0, %s312
      %s313 = sphi 0, %s310
      %s314 = sphi 0, %s313
      %s330 = sphi 0, %s314
      %s336 = sphi 0, %s338
      %s339 = sphi 0, %s336
      %s340 = sphi 0, %s339
      %s356 = sphi 0, %s340
    $region4: #{graphlet_dnn_forward.1} parent=1 // loop_header_branch
      %26 = sbr.rel (%p24) target = $region8
    $region5: #{graphlet_dnn_forward.1} parent=1 // loop_body
      %s28 = ssub.s32 %s23, 1
      %s29 = ssub.s32 %s23, 2
      %s30 = sadd.s32 %s23, 1
      %s31 = ssub.s32 %s23, %s30
      %p32 = scmp.eq.s32.totalorder %s31, 0
      %s34 = sadd.s32 %s33, 1
      %s35 = scalar_select %p32, %s33, %s34
      %p38 = pneg %p32
      %p39 = scmp.eq.s32.totalorder %s23, 1
      %p40 = por %p38, %p39
      %p41 = scmp.ne.s32.totalorder %s33, %s36
      %p42 = scmp.eq.s32.totalorder %s23, 0
      %p43 = por %p41, %p42
      %p44 = scmp.ne.s32.totalorder %s33, %s36
      %p45 = scmp.eq.s32.totalorder %s28, 1
      %p46 = por %p44, %p45
      %p47 = scmp.ne.s32.totalorder %s36, %s37
      %p48 = scmp.eq.s32.totalorder %s28, 0
      %p49 = por %p47, %p48
      %p50 = scmp.ne.s32.totalorder %s36, %s37
      %p51 = scmp.eq.s32.totalorder %s29, 1
      %p52 = por %p50, %p51
      %p54 = scmp.ne.s32.totalorder %s37, %s53
      %p55 = scmp.eq.s32.totalorder %s29, 0
      %p56 = por %p54, %p55
      %s58 = sadd.s32 %s57, 1
      %p61 = scmp.eq.s32.totalorder %s23, 1
      %p62 = scmp.ne.s32.totalorder %s57, %s59
      %p63 = scmp.eq.s32.totalorder %s23, 0
      %p64 = por %p62, %p63
      %p65 = scmp.ne.s32.totalorder %s57, %s59
      %p66 = scmp.eq.s32.totalorder %s28, 1
      %p67 = por %p65, %p66
      %p68 = scmp.ne.s32.totalorder %s59, %s60
      %p69 = scmp.eq.s32.totalorder %s28, 0
      %p70 = por %p68, %p69
      %p71 = scmp.ne.s32.totalorder %s59, %s60
      %p72 = scmp.eq.s32.totalorder %s29, 1
      %p73 = por %p71, %p72
      %p75 = scmp.ne.s32.totalorder %s60, %s74
      %p76 = scmp.eq.s32.totalorder %s29, 0
      %p77 = por %p75, %p76
      %s79 = sadd.s32 %s78, 1
      %p82 = scmp.eq.s32.totalorder %s23, 1
      %p83 = scmp.ne.s32.totalorder %s78, %s80
      %p84 = scmp.eq.s32.totalorder %s23, 0
      %p85 = por %p83, %p84
      %p86 = scmp.ne.s32.totalorder %s78, %s80
      %p87 = scmp.eq.s32.totalorder %s28, 1
      %p88 = por %p86, %p87
      %p89 = scmp.ne.s32.totalorder %s80, %s81
      %p90 = scmp.eq.s32.totalorder %s28, 0
      %p91 = por %p89, %p90
      %p92 = scmp.ne.s32.totalorder %s80, %s81
      %p93 = scmp.eq.s32.totalorder %s29, 1
      %p94 = por %p92, %p93
      %p96 = scmp.ne.s32.totalorder %s81, %s95
      %p97 = scmp.eq.s32.totalorder %s29, 0
      %p98 = por %p96, %p97
      %s100 = sadd.s32 %s99, 1
      %p103 = scmp.eq.s32.totalorder %s23, 1
      %p104 = scmp.ne.s32.totalorder %s99, %s101
      %p105 = scmp.eq.s32.totalorder %s23, 0
      %p106 = por %p104, %p105
      %p107 = scmp.ne.s32.totalorder %s99, %s101
      %p108 = scmp.eq.s32.totalorder %s28, 1
      %p109 = por %p107, %p108
      %p110 = scmp.ne.s32.totalorder %s101, %s102
      %p111 = scmp.eq.s32.totalorder %s28, 0
      %p112 = por %p110, %p111
      %p113 = scmp.ne.s32.totalorder %s101, %s102
      %p114 = scmp.eq.s32.totalorder %s29, 1
      %p115 = por %p113, %p114
      %p117 = scmp.ne.s32.totalorder %s102, %s116
      %p118 = scmp.eq.s32.totalorder %s29, 0
      %p119 = por %p117, %p118
      %s121 = sadd.s32 %s120, 1
      %p124 = scmp.eq.s32.totalorder %s23, 1
      %p125 = scmp.ne.s32.totalorder %s120, %s122
      %p126 = scmp.eq.s32.totalorder %s23, 0
      %p127 = por %p125, %p126
      %p128 = scmp.ne.s32.totalorder %s120, %s122
      %p129 = scmp.eq.s32.totalorder %s28, 1
      %p130 = por %p128, %p129
      %p131 = scmp.ne.s32.totalorder %s122, %s123
      %p132 = scmp.eq.s32.totalorder %s28, 0
      %p133 = por %p131, %p132
      %p134 = scmp.ne.s32.totalorder %s122, %s123
      %p135 = scmp.eq.s32.totalorder %s29, 1
      %p136 = por %p134, %p135
      %p138 = scmp.ne.s32.totalorder %s123, %s137
      %p139 = scmp.eq.s32.totalorder %s29, 0
      %p140 = por %p138, %p139
      %s142 = sadd.s32 %s141, 1
      %p145 = scmp.eq.s32.totalorder %s23, 1
      %p146 = scmp.ne.s32.totalorder %s141, %s143
      %p147 = scmp.eq.s32.totalorder %s23, 0
      %p148 = por %p146, %p147
      %p149 = scmp.ne.s32.totalorder %s141, %s143
      %p150 = scmp.eq.s32.totalorder %s28, 1
      %p151 = por %p149, %p150
      %p152 = scmp.ne.s32.totalorder %s143, %s144
      %p153 = scmp.eq.s32.totalorder %s28, 0
      %p154 = por %p152, %p153
      %p155 = scmp.ne.s32.totalorder %s143, %s144
      %p156 = scmp.eq.s32.totalorder %s29, 1
      %p157 = por %p155, %p156
      %p159 = scmp.ne.s32.totalorder %s144, %s158
      %p160 = scmp.eq.s32.totalorder %s29, 0
      %p161 = por %p159, %p160
      %s163 = sadd.s32 %s162, 1
      %p166 = scmp.eq.s32.totalorder %s23, 1
      %p167 = scmp.ne.s32.totalorder %s162, %s164
      %p168 = scmp.eq.s32.totalorder %s23, 0
      %p169 = por %p167, %p168
      %p170 = scmp.ne.s32.totalorder %s162, %s164
      %p171 = scmp.eq.s32.totalorder %s28, 1
      %p172 = por %p170, %p171
      %p173 = scmp.ne.s32.totalorder %s164, %s165
      %p174 = scmp.eq.s32.totalorder %s28, 0
      %p175 = por %p173, %p174
      %p176 = scmp.ne.s32.totalorder %s164, %s165
      %p177 = scmp.eq.s32.totalorder %s29, 1
      %p178 = por %p176, %p177
      %p180 = scmp.ne.s32.totalorder %s165, %s179
      %p181 = scmp.eq.s32.totalorder %s29, 0
      %p182 = por %p180, %p181
      %s184 = sadd.s32 %s183, 1
      %p187 = scmp.eq.s32.totalorder %s23, 1
      %p188 = scmp.ne.s32.totalorder %s183, %s185
      %p189 = scmp.eq.s32.totalorder %s23, 0
      %p190 = por %p188, %p189
      %p191 = scmp.ne.s32.totalorder %s183, %s185
      %p192 = scmp.eq.s32.totalorder %s28, 1
      %p193 = por %p191, %p192
      %p194 = scmp.ne.s32.totalorder %s185, %s186
      %p195 = scmp.eq.s32.totalorder %s28, 0
      %p196 = por %p194, %p195
      %p197 = scmp.ne.s32.totalorder %s185, %s186
      %p198 = scmp.eq.s32.totalorder %s29, 1
      %p199 = por %p197, %p198
      %p201 = scmp.ne.s32.totalorder %s186, %s200
      %p202 = scmp.eq.s32.totalorder %s29, 0
      %p203 = por %p201, %p202
      %s204 = ssub.s32 %s23, %s30
      %p205 = scmp.eq.s32.totalorder %s204, 0
      %s207 = sadd.s32 %s206, 1
      %s208 = scalar_select %p205, %s206, %s207
      %p211 = pneg %p205
      %p212 = scmp.eq.s32.totalorder %s23, 1
      %p213 = por %p211, %p212
      %p214 = scmp.ne.s32.totalorder %s206, %s209
      %p215 = scmp.eq.s32.totalorder %s23, 0
      %p216 = por %p214, %p215
      %p217 = scmp.ne.s32.totalorder %s206, %s209
      %p218 = scmp.eq.s32.totalorder %s28, 1
      %p219 = por %p217, %p218
      %p220 = scmp.ne.s32.totalorder %s209, %s210
      %p221 = scmp.eq.s32.totalorder %s28, 0
      %p222 = por %p220, %p221
      %p223 = scmp.ne.s32.totalorder %s209, %s210
      %p224 = scmp.eq.s32.totalorder %s29, 1
      %p225 = por %p223, %p224
      %p227 = scmp.ne.s32.totalorder %s210, %s226
      %p228 = scmp.eq.s32.totalorder %s29, 0
      %p229 = por %p227, %p228
      %s230 = ssub.s32 %s23, %s30
      %p231 = scmp.eq.s32.totalorder %s230, 0
      %s233 = sadd.s32 %s232, 1
      %s234 = scalar_select %p231, %s232, %s233
      %p237 = pneg %p231
      %p238 = scmp.eq.s32.totalorder %s23, 1
      %p239 = por %p237, %p238
      %p240 = scmp.ne.s32.totalorder %s232, %s235
      %p241 = scmp.eq.s32.totalorder %s23, 0
      %p242 = por %p240, %p241
      %p243 = scmp.ne.s32.totalorder %s232, %s235
      %p244 = scmp.eq.s32.totalorder %s28, 1
      %p245 = por %p243, %p244
      %p246 = scmp.ne.s32.totalorder %s235, %s236
      %p247 = scmp.eq.s32.totalorder %s28, 0
      %p248 = por %p246, %p247
      %p249 = scmp.ne.s32.totalorder %s235, %s236
      %p250 = scmp.eq.s32.totalorder %s29, 1
      %p251 = por %p249, %p250
      %p253 = scmp.ne.s32.totalorder %s236, %s252
      %p254 = scmp.eq.s32.totalorder %s29, 0
      %p255 = por %p253, %p254
      %s256 = ssub.s32 %s23, %s30
      %p257 = scmp.eq.s32.totalorder %s256, 0
      %s259 = sadd.s32 %s258, 1
      %s260 = scalar_select %p257, %s258, %s259
      %p263 = pneg %p257
      %p264 = scmp.eq.s32.totalorder %s23, 1
      %p265 = por %p263, %p264
      %p266 = scmp.ne.s32.totalorder %s258, %s261
      %p267 = scmp.eq.s32.totalorder %s23, 0
      %p268 = por %p266, %p267
      %p269 = scmp.ne.s32.totalorder %s258, %s261
      %p270 = scmp.eq.s32.totalorder %s28, 1
      %p271 = por %p269, %p270
      %p272 = scmp.ne.s32.totalorder %s261, %s262
      %p273 = scmp.eq.s32.totalorder %s28, 0
      %p274 = por %p272, %p273
      %p275 = scmp.ne.s32.totalorder %s261, %s262
      %p276 = scmp.eq.s32.totalorder %s29, 1
      %p277 = por %p275, %p276
      %p279 = scmp.ne.s32.totalorder %s262, %s278
      %p280 = scmp.eq.s32.totalorder %s29, 0
      %p281 = por %p279, %p280
      %s282 = ssub.s32 %s23, %s30
      %p283 = scmp.eq.s32.totalorder %s282, 0
      %s285 = sadd.s32 %s284, 1
      %s286 = scalar_select %p283, %s284, %s285
      %p289 = pneg %p283
      %p290 = scmp.eq.s32.totalorder %s23, 1
      %p291 = por %p289, %p290
      %p292 = scmp.ne.s32.totalorder %s284, %s287
      %p293 = scmp.eq.s32.totalorder %s23, 0
      %p294 = por %p292, %p293
      %p295 = scmp.ne.s32.totalorder %s284, %s287
      %p296 = scmp.eq.s32.totalorder %s28, 1
      %p297 = por %p295, %p296
      %p298 = scmp.ne.s32.totalorder %s287, %s288
      %p299 = scmp.eq.s32.totalorder %s28, 0
      %p300 = por %p298, %p299
      %p301 = scmp.ne.s32.totalorder %s287, %s288
      %p302 = scmp.eq.s32.totalorder %s29, 1
      %p303 = por %p301, %p302
      %p305 = scmp.ne.s32.totalorder %s288, %s304
      %p306 = scmp.eq.s32.totalorder %s29, 0
      %p307 = por %p305, %p306
      %s308 = ssub.s32 %s23, %s30
      %p309 = scmp.eq.s32.totalorder %s308, 0
      %s311 = sadd.s32 %s310, 1
      %s312 = scalar_select %p309, %s310, %s311
      %p315 = pneg %p309
      %p316 = scmp.eq.s32.totalorder %s23, 1
      %p317 = por %p315, %p316
      %p318 = scmp.ne.s32.totalorder %s310, %s313
      %p319 = scmp.eq.s32.totalorder %s23, 0
      %p320 = por %p318, %p319
      %p321 = scmp.ne.s32.totalorder %s310, %s313
      %p322 = scmp.eq.s32.totalorder %s28, 1
      %p323 = por %p321, %p322
      %p324 = scmp.ne.s32.totalorder %s313, %s314
      %p325 = scmp.eq.s32.totalorder %s28, 0
      %p326 = por %p324, %p325
      %p327 = scmp.ne.s32.totalorder %s313, %s314
      %p328 = scmp.eq.s32.totalorder %s29, 1
      %p329 = por %p327, %p328
      %p331 = scmp.ne.s32.totalorder %s314, %s330
      %p332 = scmp.eq.s32.totalorder %s29, 0
      %p333 = por %p331, %p332
      %s334 = ssub.s32 %s23, %s30
      %p335 = scmp.eq.s32.totalorder %s334, 0
      %s337 = sadd.s32 %s336, 1
      %s338 = scalar_select %p335, %s336, %s337
      %p341 = pneg %p335
      %p342 = scmp.eq.s32.totalorder %s23, 1
      %p343 = por %p341, %p342
      %p344 = scmp.ne.s32.totalorder %s336, %s339
      %p345 = scmp.eq.s32.totalorder %s23, 0
      %p346 = por %p344, %p345
      %p347 = scmp.ne.s32.totalorder %s336, %s339
      %p348 = scmp.eq.s32.totalorder %s28, 1
      %p349 = por %p347, %p348
      %p350 = scmp.ne.s32.totalorder %s339, %s340
      %p351 = scmp.eq.s32.totalorder %s28, 0
      %p352 = por %p350, %p351
      %p353 = scmp.ne.s32.totalorder %s339, %s340
      %p354 = scmp.eq.s32.totalorder %s29, 1
      %p355 = por %p353, %p354
      %p357 = scmp.ne.s32.totalorder %s340, %s356
      %p358 = scmp.eq.s32.totalorder %s29, 0
      %p359 = por %p357, %p358
      %p360 = scmp.le.s32.totalorder 1, %s23
      %p361 = scmp.lt.s32.totalorder %s23, 3
      %p362 = pnand %p360, %p361
      %p363 = pneg %p362
      // Predicated region
      $region9: #{graphlet_dnn_forward.1} parent=5 // pred_check
        _
      $region10: #{graphlet_dnn_forward.1} parent=5 // pred_check_branch
        %365 = sbr.rel (%p362) target = $region12
      $region11: #{graphlet_dnn_forward.1} parent=5 // pred_region
        %s366 = ssub.s32 %s23, 1
        // Predicated region
        $region13: #{graphlet_dnn_forward.1} parent=11 // pred_check
          %p367 = pneg %p70
        $region14: #{graphlet_dnn_forward.1} parent=11 // pred_check_branch
          %369 = sbr.rel (%p367) target = $region16
        $region15: #{graphlet_dnn_forward.1} parent=11 // pred_region
          _
        $region16: #{graphlet_dnn_forward.1} parent=11 // pred_fallthru
          _
        // Predicated region
        $region17: #{graphlet_dnn_forward.1} parent=11 // pred_check
          %p370 = pneg %p91
        $region18: #{graphlet_dnn_forward.1} parent=11 // pred_check_branch
          %372 = sbr.rel (%p370) target = $region20
        $region19: #{graphlet_dnn_forward.1} parent=11 // pred_region
          _
        $region20: #{graphlet_dnn_forward.1} parent=11 // pred_fallthru
          _
        // Predicated region
        $region21: #{graphlet_dnn_forward.1} parent=11 // pred_check
          %p373 = pneg %p112
        $region22: #{graphlet_dnn_forward.1} parent=11 // pred_check_branch
          %375 = sbr.rel (%p373) target = $region24
        $region23: #{graphlet_dnn_forward.1} parent=11 // pred_region
          _
        $region24: #{graphlet_dnn_forward.1} parent=11 // pred_fallthru
          _
        // Predicated region
        $region25: #{graphlet_dnn_forward.1} parent=11 // pred_check
          %p376 = pneg %p133
        $region26: #{graphlet_dnn_forward.1} parent=11 // pred_check_branch
          %378 = sbr.rel (%p376) target = $region28
        $region27: #{graphlet_dnn_forward.1} parent=11 // pred_region
          _
        $region28: #{graphlet_dnn_forward.1} parent=11 // pred_fallthru
          _
        // Predicated region
        $region29: #{graphlet_dnn_forward.1} parent=11 // pred_check
          %p379 = pneg %p154
        $region30: #{graphlet_dnn_forward.1} parent=11 // pred_check_branch
          %381 = sbr.rel (%p379) target = $region32
        $region31: #{graphlet_dnn_forward.1} parent=11 // pred_region
          _
        $region32: #{graphlet_dnn_forward.1} parent=11 // pred_fallthru
          _
        // Predicated region
        $region33: #{graphlet_dnn_forward.1} parent=11 // pred_check
          %p382 = pneg %p175
        $region34: #{graphlet_dnn_forward.1} parent=11 // pred_check_branch
          %384 = sbr.rel (%p382) target = $region36
        $region35: #{graphlet_dnn_forward.1} parent=11 // pred_region
          _
        $region36: #{graphlet_dnn_forward.1} parent=11 // pred_fallthru
          _
        // Predicated region
        $region37: #{graphlet_dnn_forward.1} parent=11 // pred_check
          %p385 = pneg %p196
        $region38: #{graphlet_dnn_forward.1} parent=11 // pred_check_branch
          %387 = sbr.rel (%p385) target = $region40
        $region39: #{graphlet_dnn_forward.1} parent=11 // pred_region
          _
        $region40: #{graphlet_dnn_forward.1} parent=11 // pred_fallthru
          _
      $region12: #{graphlet_dnn_forward.1} parent=5 // pred_fallthru
        _
      %p388 = scmp.lt.s32.totalorder %s23, 2
      // Predicated region
      $region41: #{graphlet_dnn_forward.1} parent=5 // pred_check
        %p389 = pneg %p388
      $region42: #{graphlet_dnn_forward.1} parent=5 // pred_check_branch
        %391 = sbr.rel (%p389) target = $region44
      $region43: #{graphlet_dnn_forward.1} parent=5 // pred_region
        // Predicated region
        $region45: #{graphlet_dnn_forward.1} parent=43 // pred_check
          %p392 = pneg %p43
        $region46: #{graphlet_dnn_forward.1} parent=43 // pred_check_branch
          %394 = sbr.rel (%p392) target = $region48
        $region47: #{graphlet_dnn_forward.1} parent=43 // pred_region
          %s395 = smul.u32 16, %s23
          %p396 = scmp.lt.s32.totalorder %s395, 31
          %s397 = scalar_select %p396, %s395, 31
          %s398 = smul.addr %s397, 8
          %s399 = scalar_lea.vmem %s0, %s398
          %s400 = smul.u32 16, %s23
        $region48: #{graphlet_dnn_forward.1} parent=43 // pred_fallthru
          _
        // Predicated region
        $region49: #{graphlet_dnn_forward.1} parent=43 // pred_check
          %p401 = pneg %p216
        $region50: #{graphlet_dnn_forward.1} parent=43 // pred_check_branch
          %403 = sbr.rel (%p401) target = $region52
        $region51: #{graphlet_dnn_forward.1} parent=43 // pred_region
          %p404 = scmp.lt.s32.totalorder %s23, 1
          %s405 = scalar_select %p404, %s23, 1
          %s406 = scalar_lea.vmem %s8, %s405
        $region52: #{graphlet_dnn_forward.1} parent=43 // pred_fallthru
          _
      $region44: #{graphlet_dnn_forward.1} parent=5 // pred_fallthru
        _
      %p407 = scmp.le.s32.totalorder 1, %s23
      %p408 = scmp.lt.s32.totalorder %s23, 3
      %p409 = pnand %p407, %p408
      %p410 = pneg %p409
      // Predicated region
      $region53: #{graphlet_dnn_forward.1} parent=5 // pred_check
        _
      $region54: #{graphlet_dnn_forward.1} parent=5 // pred_check_branch
        %412 = sbr.rel (%p409) target = $region56
      $region55: #{graphlet_dnn_forward.1} parent=5 // pred_region
        %s413 = ssub.s32 %s23, 1
        %s414 = smul.u32 16, %s28
        %p415 = scmp.lt.s32.totalorder %s414, 31
        %s416 = scalar_select %p415, %s414, 31
        %s417 = smul.addr %s416, 8
        %s418 = scalar_lea.vmem %s0, %s417
        %p419 = pneg %p49
        %p420 = pneg %p46
        %p421 = pneg %p70
        %p422 = pneg %p67
        %p423 = pneg %p91
        %p424 = pneg %p88
        %p425 = pneg %p112
        %p426 = pneg %p109
        %p427 = pneg %p133
        %p428 = pneg %p130
        %p429 = pneg %p154
        %p430 = pneg %p151
        %p431 = pneg %p175
        %p432 = pneg %p172
        %p433 = pneg %p196
        %p434 = pneg %p193
        %p435 = scmp.lt.s32.totalorder %s28, 1
        %s436 = scalar_select %p435, %s28, 1
        %s437 = scalar_lea.vmem %s8, %s436
        %p438 = pneg %p222
        %p439 = pneg %p219
        %p440 = pneg %p248
        %p441 = pneg %p245
        %s442 = smul.u32 16, %s28
        %p443 = scmp.lt.s32.totalorder %s442, 31
        %s444 = scalar_select %p443, %s442, 31
        %s445 = smul.addr %s444, 8
        %s446 = scalar_lea.vmem %s9, %s445
        %p447 = pneg %p274
        %p448 = pneg %p271
        %s449 = smul.u32 16, %s28
        %p450 = scmp.lt.s32.totalorder %s449, 31
        %s451 = scalar_select %p450, %s449, 31
        %s452 = smul.addr %s451, 8
        %s453 = scalar_lea.vmem %s10, %s452
        %p454 = pneg %p300
        %p455 = pneg %p297
        %s456 = smul.u32 16, %s28
        %p457 = scmp.lt.s32.totalorder %s456, 31
        %s458 = scalar_select %p457, %s456, 31
        %s459 = smul.addr %s458, 8
        %s460 = scalar_lea.vmem %s11, %s459
        %p461 = pneg %p326
        %p462 = pneg %p323
        %s463 = sand.u32 %s313, 1
        %s464 = scalar_lea.sflag [#allocation3], %s463
        %s465 = sand.u32 %s313, 1
        %s466 = scalar_lea.vmem [#allocation2], %s465
        %p467 = pneg %p352
        %p468 = pneg %p349
        %p469 = scmp.lt.s32.totalorder %s28, 1
        %s470 = scalar_select %p469, %s28, 1
        %s471 = scalar_lea.vmem %s13, %s470
        %s472 = smul.u32 16, %s28
        %p473 = scmp.lt.s32.totalorder %s472, 31
        %s474 = scalar_select %p473, %s472, 31
        %s475 = smul.addr %s474, 8
        %s476 = scalar_lea.vmem %s0, %s475
        %s477 = smul.u32 16, %s28
        %p478 = scmp.lt.s32.totalorder %s28, 1
        %s479 = scalar_select %p478, %s28, 1
        %s480 = scalar_lea.vmem %s8, %s479
        %s481 = smul.u32 16, %s28
        %p482 = scmp.lt.s32.totalorder %s481, 31
        %s483 = scalar_select %p482, %s481, 31
        %s484 = smul.addr %s483, 8
        %s485 = scalar_lea.vmem %s9, %s484
        %s486 = smul.u32 16, %s28
        %s487 = smul.u32 16, %s28
        %p488 = scmp.lt.s32.totalorder %s487, 31
        %s489 = scalar_select %p488, %s487, 31
        %s490 = smul.addr %s489, 8
        %s491 = scalar_lea.vmem %s10, %s490
        %s492 = smul.u32 16, %s28
        %s493 = smul.u32 16, %s28
        %p494 = scmp.lt.s32.totalorder %s493, 31
        %s495 = scalar_select %p494, %s493, 31
        %s496 = smul.addr %s495, 8
        %s497 = scalar_lea.vmem %s11, %s496
        %s498 = smul.u32 16, %s28
        %p499 = scmp.lt.s32.totalorder %s28, 1
        %s500 = scalar_select %p499, %s28, 1
        %s501 = scalar_lea.vmem %s13, %s500
        %v502 = vld [vmem:[%s476] sm:$0xff]
        %v503 = vld [vmem:[%s476 + $0x8] sm:$0xff]
        %v504 = vld [vmem:[%s476 + $0x10] sm:$0xff]
        %v505 = vld [vmem:[%s476 + $0x18] sm:$0xff]
        %v506 = vld [vmem:[%s476 + $0x20] sm:$0xff]
        %v507 = vld [vmem:[%s476 + $0x28] sm:$0xff]
        %v508 = vld [vmem:[%s476 + $0x30] sm:$0xff]
        %v509 = vld [vmem:[%s476 + $0x38] sm:$0xff]
        %v510 = vld [vmem:[%s476 + $0x40] sm:$0xff]
        %v511 = vld [vmem:[%s476 + $0x48] sm:$0xff]
        %v512 = vld [vmem:[%s476 + $0x50] sm:$0xff]
        %v513 = vld [vmem:[%s476 + $0x58] sm:$0xff]
        %v514 = vld [vmem:[%s476 + $0x60] sm:$0xff]
        %v515 = vld [vmem:[%s476 + $0x68] sm:$0xff]
        %v516 = vld [vmem:[%s476 + $0x70] sm:$0xff]
        %v517 = vld [vmem:[%s476 + $0x78] sm:$0xff]
        %v518 = vld [vmem:[%s1] sm:$0xff]
        %v519 = vld [vmem:[%s1 + $0x8] sm:$0xff]
        %v520 = vld [vmem:[%s1 + $0x10] sm:$0xff]
        %v521 = vld [vmem:[%s1 + $0x18] sm:$0xff]
        %v522 = vld [vmem:[%s2] sm:$0xff]
        %v523 = vld [vmem:[%s2 + $0x8] sm:$0xff]
        %v524 = vld [vmem:[%s2 + $0x10] sm:$0xff]
        %v525 = vld [vmem:[%s2 + $0x18] sm:$0xff]
        %527 = vset.pattern.permute.xlu0 0
        %528 = vperm.xlu0 %527, %v522
        %v529 = vpop.permute.xlu0 %528
        %532 = vset.pattern.permute.xlu0 0
        %533 = vperm.xlu0 %532, %v523
        %v534 = vpop.permute.xlu0 %533
        %537 = vset.pattern.permute.xlu0 0
        %538 = vperm.xlu0 %537, %v524
        %v539 = vpop.permute.xlu0 %538
        %542 = vset.pattern.permute.xlu0 0
        %543 = vperm.xlu0 %542, %v525
        %v544 = vpop.permute.xlu0 %543
        %vm546 = vcmask 130048
        %v548 = vsel %vm546, %v518, 0
        %v551 = vsel %vm546, %v519, 0
        %v554 = vsel %vm546, %v520, 0
        %v557 = vsel %vm546, %v521, 0
        %v560 = vsel %vm546, %v502, 0
        %v563 = vsel %vm546, %v503, 0
        %v566 = vsel %vm546, %v504, 0
        %v569 = vsel %vm546, %v505, 0
        %v572 = vsel %vm546, %v506, 0
        %v575 = vsel %vm546, %v507, 0
        %v578 = vsel %vm546, %v508, 0
        %v581 = vsel %vm546, %v509, 0
        %v584 = vsel %vm546, %v510, 0
        %v587 = vsel %vm546, %v511, 0
        %v590 = vsel %vm546, %v512, 0
        %v593 = vsel %vm546, %v513, 0
        %v596 = vsel %vm546, %v514, 0
        %v599 = vsel %vm546, %v515, 0
        %v602 = vsel %vm546, %v516, 0
        %v605 = vsel %vm546, %v517, 0
        %607 = vmatprep.subr.mxu0 0.0
        %608 = vmatpush1.xpose.msra.mxu0 %v560
        %609 = vmatprep.subr.mxu0 0.0
        %610 = vmatpush1.xpose.msra.mxu0 %v563
        %611 = vmatprep.subr.mxu0 0.0
        %612 = vmatpush1.xpose.msra.mxu0 %v566
        %613 = vmatprep.subr.mxu0 0.0
        %614 = vmatpush1.xpose.msra.mxu0 %v569
        %615 = vmatprep.subr.mxu0 0.0
        %616 = vmatpush1.xpose.msra.mxu0 %v572
        %617 = vmatprep.subr.mxu0 0.0
        %618 = vmatpush1.xpose.msra.mxu0 %v575
        %619 = vmatprep.subr.mxu0 0.0
        %620 = vmatpush1.xpose.msra.mxu0 %v578
        %621 = vmatprep.subr.mxu0 0.0
        %622 = vmatpush1.xpose.msra.mxu0 %v581
        %623 = vmatprep.subr.mxu0 0.0
        %624 = vmatpush1.xpose.msra.mxu0 %v584
        %625 = vmatprep.subr.mxu0 0.0
        %626 = vmatpush1.xpose.msra.mxu0 %v587
        %627 = vmatprep.subr.mxu0 0.0
        %628 = vmatpush1.xpose.msra.mxu0 %v590
        %629 = vmatprep.subr.mxu0 0.0
        %630 = vmatpush1.xpose.msra.mxu0 %v593
        %631 = vmatprep.subr.mxu0 0.0
        %632 = vmatpush1.xpose.msra.mxu0 %v596
        %633 = vmatprep.subr.mxu0 0.0
        %634 = vmatpush1.xpose.msra.mxu0 %v599
        %635 = vmatprep.subr.mxu0 0.0
        %636 = vmatpush1.xpose.msra.mxu0 %v602
        %637 = vmatprep.subr.mxu0 0.0
        %638 = vmatpush1.xpose.msra.mxu0 %v605
        %639 = vmatprep.subr.mxu0 0.0
        %640 = vmatpush1.xpose.msra.mxu0 0.0
        %641 = vmatprep.subr.mxu0 0.0
        %642 = vmatpush1.xpose.msra.mxu0 0.0
        %643 = vmatprep.subr.mxu0 0.0
        %644 = vmatpush1.xpose.msra.mxu0 0.0
        %645 = vmatprep.subr.mxu0 0.0
        %646 = vmatpush1.xpose.msra.mxu0 0.0
        %647 = vmatprep.subr.mxu0 0.0
        %648 = vmatpush1.xpose.msra.mxu0 0.0
        %649 = vmatprep.subr.mxu0 0.0
        %650 = vmatpush1.xpose.msra.mxu0 0.0
        %651 = vmatprep.subr.mxu0 0.0
        %652 = vmatpush1.xpose.msra.mxu0 0.0
        %653 = vmatprep.subr.mxu0 0.0
        %654 = vmatpush1.xpose.msra.mxu0 0.0
        %655 = vmatprep.subr.mxu0 0.0
        %656 = vmatpush1.xpose.msra.mxu0 0.0
        %657 = vmatprep.subr.mxu0 0.0
        %658 = vmatpush1.xpose.msra.mxu0 0.0
        %659 = vmatprep.subr.mxu0 0.0
        %660 = vmatpush1.xpose.msra.mxu0 0.0
        %661 = vmatprep.subr.mxu0 0.0
        %662 = vmatpush1.xpose.msra.mxu0 0.0
        %663 = vmatprep.subr.mxu0 0.0
        %664 = vmatpush1.xpose.msra.mxu0 0.0
        %665 = vmatprep.subr.mxu0 0.0
        %666 = vmatpush1.xpose.msra.mxu0 0.0
        %667 = vmatprep.subr.mxu0 0.0
        %668 = vmatpush1.xpose.msra.mxu0 0.0
        %669 = vmatprep.subr.mxu0 0.0
        %670 = vmatpush1.xpose.msra.mxu0 0.0
        %671 = vmatprep.mubr.f32.mxu0 0.0
        %672 = vmatmul.mubr.f32.gmra.mrb[0].mxu0 %v548
        %v673 = vpop.f32.mrb[0].mxu0
        %v674 = vadd.f32 %v529, %v673
        %v675 = vpop.f32.mrb[0].mxu0
        %676 = vmatprep.mubr.f32.mxu0 0.0
        %677 = vmatmul.mubr.f32.gmra.mrb[0].mxu0 %v551
        %v678 = vpop.f32.mrb[0].mxu0
        %v679 = vadd.f32 %v534, %v678
        %v680 = vpop.f32.mrb[0].mxu0
        %681 = vmatprep.mubr.f32.mxu0 0.0
        %682 = vmatmul.mubr.f32.gmra.mrb[0].mxu0 %v554
        %v683 = vpop.f32.mrb[0].mxu0
        %v684 = vadd.f32 %v539, %v683
        %v685 = vpop.f32.mrb[0].mxu0
        %686 = vmatprep.mubr.f32.mxu0 0.0
        %687 = vmatmul.mubr.f32.gmra.mrb[0].mxu0 %v557
        %v688 = vpop.f32.mrb[0].mxu0
        %v689 = vadd.f32 %v544, %v688
        %v690 = vpop.f32.mrb[0].mxu0
        %691 = vdwg.mxu0
        %v692 = vtanh.pop %v674
        %v693 = vtanh.pop %v679
        %v694 = vtanh.pop %v684
        %v695 = vtanh.pop %v689
        %v696 = vld [vmem:[%s3] sm:$0xff]
        %v697 = vld [vmem:[%s3 + $0x8] sm:$0xff]
        %v698 = vld [vmem:[%s3 + $0x10] sm:$0xff]
        %v699 = vld [vmem:[%s3 + $0x18] sm:$0xff]
        %v700 = vld [vmem:[%s4] sm:$0xff]
        %v701 = vld [vmem:[%s4 + $0x8] sm:$0xff]
        %v702 = vld [vmem:[%s4 + $0x10] sm:$0xff]
        %v703 = vld [vmem:[%s4 + $0x18] sm:$0xff]
        %705 = vset.pattern.permute.xlu0 0
        %706 = vperm.xlu0 %705, %v700
        %v707 = vpop.permute.xlu0 %706
        %710 = vset.pattern.permute.xlu0 0
        %711 = vperm.xlu0 %710, %v701
        %v712 = vpop.permute.xlu0 %711
        %715 = vset.pattern.permute.xlu0 0
        %716 = vperm.xlu0 %715, %v702
        %v717 = vpop.permute.xlu0 %716
        %720 = vset.pattern.permute.xlu0 0
        %721 = vperm.xlu0 %720, %v703
        %v722 = vpop.permute.xlu0 %721
        %vm724 = vcmask 261120
        %v726 = vsel %vm724, %v696, 0
        %v729 = vsel %vm724, %v697, 0
        %v732 = vsel %vm724, %v698, 0
        %v735 = vsel %vm724, %v699, 0
        %737 = vmatprep.subr.mxu0 0.0
        %738 = vmatpush1.msra.mxu0 %v692
        %739 = vmatprep.subr.mxu0 0.0
        %740 = vmatpush1.msra.mxu0 %v693
        %741 = vmatprep.subr.mxu0 0.0
        %742 = vmatpush1.msra.mxu0 %v694
        %743 = vmatprep.subr.mxu0 0.0
        %744 = vmatpush1.msra.mxu0 %v695
        %745 = vmatprep.subr.mxu0 0.0
        %746 = vmatpush1.msra.mxu0 0.0
        %747 = vmatprep.subr.mxu0 0.0
        %748 = vmatpush1.msra.mxu0 0.0
        %749 = vmatprep.subr.mxu0 0.0
        %750 = vmatpush1.msra.mxu0 0.0
        %751 = vmatprep.subr.mxu0 0.0
        %752 = vmatpush1.msra.mxu0 0.0
        %753 = vmatprep.subr.mxu0 0.0
        %754 = vmatpush1.msra.mxu0 0.0
        %755 = vmatprep.subr.mxu0 0.0
        %756 = vmatpush1.msra.mxu0 0.0
        %757 = vmatprep.subr.mxu0 0.0
        %758 = vmatpush1.msra.mxu0 0.0
        %759 = vmatprep.subr.mxu0 0.0
        %760 = vmatpush1.msra.mxu0 0.0
        %761 = vmatprep.subr.mxu0 0.0
        %762 = vmatpush1.msra.mxu0 0.0
        %763 = vmatprep.subr.mxu0 0.0
        %764 = vmatpush1.msra.mxu0 0.0
        %765 = vmatprep.subr.mxu0 0.0
        %766 = vmatpush1.msra.mxu0 0.0
        %767 = vmatprep.subr.mxu0 0.0
        %768 = vmatpush1.msra.mxu0 0.0
        %769 = vmatprep.subr.mxu0 0.0
        %770 = vmatpush1.msra.mxu0 0.0
        %771 = vmatprep.subr.mxu0 0.0
        %772 = vmatpush1.msra.mxu0 0.0
        %773 = vmatprep.subr.mxu0 0.0
        %774 = vmatpush1.msra.mxu0 0.0
        %775 = vmatprep.subr.mxu0 0.0
        %776 = vmatpush1.msra.mxu0 0.0
        %777 = vmatprep.subr.mxu0 0.0
        %778 = vmatpush1.msra.mxu0 0.0
        %779 = vmatprep.subr.mxu0 0.0
        %780 = vmatpush1.msra.mxu0 0.0
        %781 = vmatprep.subr.mxu0 0.0
        %782 = vmatpush1.msra.mxu0 0.0
        %783 = vmatprep.subr.mxu0 0.0
        %784 = vmatpush1.msra.mxu0 0.0
        %785 = vmatprep.subr.mxu0 0.0
        %786 = vmatpush1.msra.mxu0 0.0
        %787 = vmatprep.subr.mxu0 0.0
        %788 = vmatpush1.msra.mxu0 0.0
        %789 = vmatprep.subr.mxu0 0.0
        %790 = vmatpush1.msra.mxu0 0.0
        %791 = vmatprep.subr.mxu0 0.0
        %792 = vmatpush1.msra.mxu0 0.0
        %793 = vmatprep.subr.mxu0 0.0
        %794 = vmatpush1.msra.mxu0 0.0
        %795 = vmatprep.subr.mxu0 0.0
        %796 = vmatpush1.msra.mxu0 0.0
        %797 = vmatprep.subr.mxu0 0.0
        %798 = vmatpush1.msra.mxu0 0.0
        %799 = vmatprep.subr.mxu0 0.0
        %800 = vmatpush1.msra.mxu0 0.0
        %801 = vmatprep.mubr.f32.mxu0 0.0
        %802 = vmatmul.mubr.f32.gmra.mrb[0].mxu0 %v726
        %v803 = vpop.f32.mrb[0].mxu0
        %v804 = vadd.f32 %v707, %v803
        %v805 = vpop.f32.mrb[0].mxu0
        %806 = vmatprep.mubr.f32.mxu0 0.0
        %807 = vmatmul.mubr.f32.gmra.mrb[0].mxu0 %v729
        %v808 = vpop.f32.mrb[0].mxu0
        %v809 = vadd.f32 %v712, %v808
        %v810 = vpop.f32.mrb[0].mxu0
        %811 = vmatprep.mubr.f32.mxu0 0.0
        %812 = vmatmul.mubr.f32.gmra.mrb[0].mxu0 %v732
        %v813 = vpop.f32.mrb[0].mxu0
        %v814 = vadd.f32 %v717, %v813
        %v815 = vpop.f32.mrb[0].mxu0
        %816 = vmatprep.mubr.f32.mxu0 0.0
        %817 = vmatmul.mubr.f32.gmra.mrb[0].mxu0 %v735
        %v818 = vpop.f32.mrb[0].mxu0
        %v819 = vadd.f32 %v722, %v818
        %v820 = vpop.f32.mrb[0].mxu0
        %821 = vdwg.mxu0
        %v822 = vtanh.pop %v804
        %v823 = vtanh.pop %v809
        %v824 = vtanh.pop %v814
        %v825 = vtanh.pop %v819
        %v826 = vld [vmem:[%s5] sm:$0xf]
        %v827 = vld [vmem:[%s6] sm:$0xf]
        %829 = vset.pattern.permute.xlu0 0
        %830 = vperm.xlu0 %829, %v827
        %v831 = vpop.permute.xlu0 %830
        %v834 = vsel %vm724, %v826, 0
        %836 = vmatprep.subr.mxu0 0.0
        %837 = vmatpush1.msra.mxu0 %v822
        %838 = vmatprep.subr.mxu0 0.0
        %839 = vmatpush1.msra.mxu0 %v823
        %840 = vmatprep.subr.mxu0 0.0
        %841 = vmatpush1.msra.mxu0 %v824
        %842 = vmatprep.subr.mxu0 0.0
        %843 = vmatpush1.msra.mxu0 %v825
        %844 = vmatprep.subr.mxu0 0.0
        %845 = vmatpush1.msra.mxu0 0.0
        %846 = vmatprep.subr.mxu0 0.0
        %847 = vmatpush1.msra.mxu0 0.0
        %848 = vmatprep.subr.mxu0 0.0
        %849 = vmatpush1.msra.mxu0 0.0
        %850 = vmatprep.subr.mxu0 0.0
        %851 = vmatpush1.msra.mxu0 0.0
        %852 = vmatprep.subr.mxu0 0.0
        %853 = vmatpush1.msra.mxu0 0.0
        %854 = vmatprep.subr.mxu0 0.0
        %855 = vmatpush1.msra.mxu0 0.0
        %856 = vmatprep.subr.mxu0 0.0
        %857 = vmatpush1.msra.mxu0 0.0
        %858 = vmatprep.subr.mxu0 0.0
        %859 = vmatpush1.msra.mxu0 0.0
        %860 = vmatprep.subr.mxu0 0.0
        %861 = vmatpush1.msra.mxu0 0.0
        %862 = vmatprep.subr.mxu0 0.0
        %863 = vmatpush1.msra.mxu0 0.0
        %864 = vmatprep.subr.mxu0 0.0
        %865 = vmatpush1.msra.mxu0 0.0
        %866 = vmatprep.subr.mxu0 0.0
        %867 = vmatpush1.msra.mxu0 0.0
        %868 = vmatprep.subr.mxu0 0.0
        %869 = vmatpush1.msra.mxu0 0.0
        %870 = vmatprep.subr.mxu0 0.0
        %871 = vmatpush1.msra.mxu0 0.0
        %872 = vmatprep.subr.mxu0 0.0
        %873 = vmatpush1.msra.mxu0 0.0
        %874 = vmatprep.subr.mxu0 0.0
        %875 = vmatpush1.msra.mxu0 0.0
        %876 = vmatprep.subr.mxu0 0.0
        %877 = vmatpush1.msra.mxu0 0.0
        %878 = vmatprep.subr.mxu0 0.0
        %879 = vmatpush1.msra.mxu0 0.0
        %880 = vmatprep.subr.mxu0 0.0
        %881 = vmatpush1.msra.mxu0 0.0
        %882 = vmatprep.subr.mxu0 0.0
        %883 = vmatpush1.msra.mxu0 0.0
        %884 = vmatprep.subr.mxu0 0.0
        %885 = vmatpush1.msra.mxu0 0.0
        %886 = vmatprep.subr.mxu0 0.0
        %887 = vmatpush1.msra.mxu0 0.0
        %888 = vmatprep.subr.mxu0 0.0
        %889 = vmatpush1.msra.mxu0 0.0
        %890 = vmatprep.subr.mxu0 0.0
        %891 = vmatpush1.msra.mxu0 0.0
        %892 = vmatprep.subr.mxu0 0.0
        %893 = vmatpush1.msra.mxu0 0.0
        %894 = vmatprep.subr.mxu0 0.0
        %895 = vmatpush1.msra.mxu0 0.0
        %896 = vmatprep.subr.mxu0 0.0
        %897 = vmatpush1.msra.mxu0 0.0
        %898 = vmatprep.subr.mxu0 0.0
        %899 = vmatpush1.msra.mxu0 0.0
        %900 = vmatprep.mubr.f32.mxu0 0.0
        %901 = vmatmul.mubr.f32.gmra.mrb[0].mxu0 %v834
        %v902 = vpop.f32.mrb[0].mxu0
        %v903 = vadd.f32 %v831, %v902
        %v904 = vpop.f32.mrb[0].mxu0
        %905 = vdwg.mxu0
        %906 = vxpose.xlu0.b32.start [1/16] %v692, 128
        %907 = vxpose.xlu0.b32.cont [2/16] %v693, 128
        %908 = vxpose.xlu0.b32.cont [3/16] %v694, 128
        %909 = vxpose.xlu0.b32.cont [4/16] %v695, 128
        %910 = vxpose.xlu0.b32.cont [5/16] 0.0, 128
        %911 = vxpose.xlu0.b32.cont [6/16] 0.0, 128
        %912 = vxpose.xlu0.b32.cont [7/16] 0.0, 128
        %913 = vxpose.xlu0.b32.cont [8/16] 0.0, 128
        %914 = vxpose.xlu0.b32.cont [9/16] 0.0, 128
        %915 = vxpose.xlu0.b32.cont [10/16] 0.0, 128
        %916 = vxpose.xlu0.b32.cont [11/16] 0.0, 128
        %917 = vxpose.xlu0.b32.cont [12/16] 0.0, 128
        %918 = vxpose.xlu0.b32.cont [13/16] 0.0, 128
        %919 = vxpose.xlu0.b32.cont [14/16] 0.0, 128
        %920 = vxpose.xlu0.b32.cont [15/16] 0.0, 128
        %921 = vxpose.xlu0.b32.end [16/16] 0.0, 128
        %v922 = vpop.trf.xlu0
        %v923 = vpop.trf.xlu0
        %v924 = vpop.trf.xlu0
        %v925 = vpop.trf.xlu0
        %v926 = vpop.trf.xlu0
        %v927 = vpop.trf.xlu0
        %v928 = vpop.trf.xlu0
        %v929 = vpop.trf.xlu0
        %v930 = vpop.trf.xlu0
        %v931 = vpop.trf.xlu0
        %v932 = vpop.trf.xlu0
        %v933 = vpop.trf.xlu0
        %v934 = vpop.trf.xlu0
        %v935 = vpop.trf.xlu0
        %v936 = vpop.trf.xlu0
        %v937 = vpop.trf.xlu0
        %938 = vst.msk [vmem:[%s485] sm:$0xff] %vm724, %v922
        %939 = vst.msk [vmem:[%s485 + $0x8] sm:$0xff] %vm724, %v923
        %940 = vst.msk [vmem:[%s485 + $0x10] sm:$0xff] %vm724, %v924
        %941 = vst.msk [vmem:[%s485 + $0x18] sm:$0xff] %vm724, %v925
        %942 = vst.msk [vmem:[%s485 + $0x20] sm:$0xff] %vm724, %v926
        %943 = vst.msk [vmem:[%s485 + $0x28] sm:$0xff] %vm724, %v927
        %944 = vst.msk [vmem:[%s485 + $0x30] sm:$0xff] %vm724, %v928
        %945 = vst.msk [vmem:[%s485 + $0x38] sm:$0xff] %vm724, %v929
        %946 = vst.msk [vmem:[%s485 + $0x40] sm:$0xff] %vm724, %v930
        %947 = vst.msk [vmem:[%s485 + $0x48] sm:$0xff] %vm724, %v931
        %948 = vst.msk [vmem:[%s485 + $0x50] sm:$0xff] %vm724, %v932
        %949 = vst.msk [vmem:[%s485 + $0x58] sm:$0xff] %vm724, %v933
        %950 = vst.msk [vmem:[%s485 + $0x60] sm:$0xff] %vm724, %v934
        %951 = vst.msk [vmem:[%s485 + $0x68] sm:$0xff] %vm724, %v935
        %952 = vst.msk [vmem:[%s485 + $0x70] sm:$0xff] %vm724, %v936
        %953 = vst.msk [vmem:[%s485 + $0x78] sm:$0xff] %vm724, %v937
        %954 = vxpose.xlu0.b32.start [1/16] %v822, 128
        %955 = vxpose.xlu0.b32.cont [2/16] %v823, 128
        %956 = vxpose.xlu0.b32.cont [3/16] %v824, 128
        %957 = vxpose.xlu0.b32.cont [4/16] %v825, 128
        %958 = vxpose.xlu0.b32.cont [5/16] 0.0, 128
        %959 = vxpose.xlu0.b32.cont [6/16] 0.0, 128
        %960 = vxpose.xlu0.b32.cont [7/16] 0.0, 128
        %961 = vxpose.xlu0.b32.cont [8/16] 0.0, 128
        %962 = vxpose.xlu0.b32.cont [9/16] 0.0, 128
        %963 = vxpose.xlu0.b32.cont [10/16] 0.0, 128
        %964 = vxpose.xlu0.b32.cont [11/16] 0.0, 128
        %965 = vxpose.xlu0.b32.cont [12/16] 0.0, 128
        %966 = vxpose.xlu0.b32.cont [13/16] 0.0, 128
        %967 = vxpose.xlu0.b32.cont [14/16] 0.0, 128
        %968 = vxpose.xlu0.b32.cont [15/16] 0.0, 128
        %969 = vxpose.xlu0.b32.end [16/16] 0.0, 128
        %v970 = vpop.trf.xlu0
        %v971 = vpop.trf.xlu0
        %v972 = vpop.trf.xlu0
        %v973 = vpop.trf.xlu0
        %v974 = vpop.trf.xlu0
        %v975 = vpop.trf.xlu0
        %v976 = vpop.trf.xlu0
        %v977 = vpop.trf.xlu0
        %v978 = vpop.trf.xlu0
        %v979 = vpop.trf.xlu0
        %v980 = vpop.trf.xlu0
        %v981 = vpop.trf.xlu0
        %v982 = vpop.trf.xlu0
        %v983 = vpop.trf.xlu0
        %v984 = vpop.trf.xlu0
        %v985 = vpop.trf.xlu0
        %986 = vst.msk [vmem:[%s491] sm:$0xff] %vm724, %v970
        %987 = vst.msk [vmem:[%s491 + $0x8] sm:$0xff] %vm724, %v971
        %988 = vst.msk [vmem:[%s491 + $0x10] sm:$0xff] %vm724, %v972
        %989 = vst.msk [vmem:[%s491 + $0x18] sm:$0xff] %vm724, %v973
        %990 = vst.msk [vmem:[%s491 + $0x20] sm:$0xff] %vm724, %v974
        %991 = vst.msk [vmem:[%s491 + $0x28] sm:$0xff] %vm724, %v975
        %992 = vst.msk [vmem:[%s491 + $0x30] sm:$0xff] %vm724, %v976
        %993 = vst.msk [vmem:[%s491 + $0x38] sm:$0xff] %vm724, %v977
        %994 = vst.msk [vmem:[%s491 + $0x40] sm:$0xff] %vm724, %v978
        %995 = vst.msk [vmem:[%s491 + $0x48] sm:$0xff] %vm724, %v979
        %996 = vst.msk [vmem:[%s491 + $0x50] sm:$0xff] %vm724, %v980
        %997 = vst.msk [vmem:[%s491 + $0x58] sm:$0xff] %vm724, %v981
        %998 = vst.msk [vmem:[%s491 + $0x60] sm:$0xff] %vm724, %v982
        %999 = vst.msk [vmem:[%s491 + $0x68] sm:$0xff] %vm724, %v983
        %1000 = vst.msk [vmem:[%s491 + $0x70] sm:$0xff] %vm724, %v984
        %1001 = vst.msk [vmem:[%s491 + $0x78] sm:$0xff] %vm724, %v985
        %v1002 = vld [vmem:[%s5] sm:$0xf]
        %v1003 = vld [vmem:[%s7] sm:$0x1]
        %v1005 = vlaneseq
        %v1006 = vshrl.u32 %v1005, 7
        %v1007 = vsub.s32 0, %v1006
        %v1008 = vrot.slane %v1003, %v1007
        %v1011 = vsel %vm724, %v970, 0
        %v1014 = vsel %vm724, %v971, 0
        %v1017 = vsel %vm724, %v972, 0
        %v1020 = vsel %vm724, %v973, 0
        %v1023 = vsel %vm724, %v974, 0
        %v1026 = vsel %vm724, %v975, 0
        %v1029 = vsel %vm724, %v976, 0
        %v1032 = vsel %vm724, %v977, 0
        %v1035 = vsel %vm724, %v978, 0
        %v1038 = vsel %vm724, %v979, 0
        %v1041 = vsel %vm724, %v980, 0
        %v1044 = vsel %vm724, %v981, 0
        %v1047 = vsel %vm724, %v982, 0
        %v1050 = vsel %vm724, %v983, 0
        %v1053 = vsel %vm724, %v984, 0
        %v1056 = vsel %vm724, %v985, 0
        %v1059 = vsel %vm724, %v1002, 0
        %1061 = vmatprep.subr.mxu0 0.0
        %1062 = vmatpush1.xpose.msra.mxu0 %v1059
        %1063 = vmatprep.subr.mxu0 0.0
        %1064 = vmatpush1.xpose.msra.mxu0 0.0
        %1065 = vmatprep.subr.mxu0 0.0
        %1066 = vmatpush1.xpose.msra.mxu0 0.0
        %1067 = vmatprep.subr.mxu0 0.0
        %1068 = vmatpush1.xpose.msra.mxu0 0.0
        %1069 = vmatprep.subr.mxu0 0.0
        %1070 = vmatpush1.xpose.msra.mxu0 0.0
        %1071 = vmatprep.subr.mxu0 0.0
        %1072 = vmatpush1.xpose.msra.mxu0 0.0
        %1073 = vmatprep.subr.mxu0 0.0
        %1074 = vmatpush1.xpose.msra.mxu0 0.0
        %1075 = vmatprep.subr.mxu0 0.0
        %1076 = vmatpush1.xpose.msra.mxu0 0.0
        %1077 = vmatprep.subr.mxu0 0.0
        %1078 = vmatpush1.xpose.msra.mxu0 0.0
        %1079 = vmatprep.subr.mxu0 0.0
        %1080 = vmatpush1.xpose.msra.mxu0 0.0
        %1081 = vmatprep.subr.mxu0 0.0
        %1082 = vmatpush1.xpose.msra.mxu0 0.0
        %1083 = vmatprep.subr.mxu0 0.0
        %1084 = vmatpush1.xpose.msra.mxu0 0.0
        %1085 = vmatprep.subr.mxu0 0.0
        %1086 = vmatpush1.xpose.msra.mxu0 0.0
        %1087 = vmatprep.subr.mxu0 0.0
        %1088 = vmatpush1.xpose.msra.mxu0 0.0
        %1089 = vmatprep.subr.mxu0 0.0
        %1090 = vmatpush1.xpose.msra.mxu0 0.0
        %1091 = vmatprep.subr.mxu0 0.0
        %1092 = vmatpush1.xpose.msra.mxu0 0.0
        %1093 = vmatprep.subr.mxu0 0.0
        %1094 = vmatpush1.xpose.msra.mxu0 0.0
        %1095 = vmatprep.subr.mxu0 0.0
        %1096 = vmatpush1.xpose.msra.mxu0 0.0
        %1097 = vmatprep.subr.mxu0 0.0
        %1098 = vmatpush1.xpose.msra.mxu0 0.0
        %1099 = vmatprep.subr.mxu0 0.0
        %1100 = vmatpush1.xpose.msra.mxu0 0.0
        %1101 = vmatprep.subr.mxu0 0.0
        %1102 = vmatpush1.xpose.msra.mxu0 0.0
        %1103 = vmatprep.subr.mxu0 0.0
        %1104 = vmatpush1.xpose.msra.mxu0 0.0
        %1105 = vmatprep.subr.mxu0 0.0
        %1106 = vmatpush1.xpose.msra.mxu0 0.0
        %1107 = vmatprep.subr.mxu0 0.0
        %1108 = vmatpush1.xpose.msra.mxu0 0.0
        %1109 = vmatprep.subr.mxu0 0.0
        %1110 = vmatpush1.xpose.msra.mxu0 0.0
        %1111 = vmatprep.subr.mxu0 0.0
        %1112 = vmatpush1.xpose.msra.mxu0 0.0
        %1113 = vmatprep.subr.mxu0 0.0
        %1114 = vmatpush1.xpose.msra.mxu0 0.0
        %1115 = vmatprep.subr.mxu0 0.0
        %1116 = vmatpush1.xpose.msra.mxu0 0.0
        %1117 = vmatprep.subr.mxu0 0.0
        %1118 = vmatpush1.xpose.msra.mxu0 0.0
        %1119 = vmatprep.subr.mxu0 0.0
        %1120 = vmatpush1.xpose.msra.mxu0 0.0
        %1121 = vmatprep.subr.mxu0 0.0
        %1122 = vmatpush1.xpose.msra.mxu0 0.0
        %1123 = vmatprep.subr.mxu0 0.0
        %1124 = vmatpush1.xpose.msra.mxu0 0.0
        %1125 = vmatprep.mubr.f32.mxu0 0.0
        %1126 = vmatmul.mubr.f32.gmra.mrb[0].mxu0 %v1011
        %v1127 = vpop.f32.mrb[0].mxu0
        %v1128 = vadd.f32 %v1008, %v1127
        %v1129 = vpop.f32.mrb[0].mxu0
        %1130 = vmatprep.mubr.f32.mxu0 0.0
        %1131 = vmatmul.mubr.f32.gmra.mrb[0].mxu0 %v1014
        %v1132 = vpop.f32.mrb[0].mxu0
        %v1133 = vadd.f32 %v1008, %v1132
        %v1134 = vpop.f32.mrb[0].mxu0
        %1135 = vmatprep.mubr.f32.mxu0 0.0
        %1136 = vmatmul.mubr.f32.gmra.mrb[0].mxu0 %v1017
        %v1137 = vpop.f32.mrb[0].mxu0
        %v1138 = vadd.f32 %v1008, %v1137
        %v1139 = vpop.f32.mrb[0].mxu0
        %1140 = vmatprep.mubr.f32.mxu0 0.0
        %1141 = vmatmul.mubr.f32.gmra.mrb[0].mxu0 %v1020
        %v1142 = vpop.f32.mrb[0].mxu0
        %v1143 = vadd.f32 %v1008, %v1142
        %v1144 = vpop.f32.mrb[0].mxu0
        %1145 = vmatprep.mubr.f32.mxu0 0.0
        %1146 = vmatmul.mubr.f32.gmra.mrb[0].mxu0 %v1023
        %v1147 = vpop.f32.mrb[0].mxu0
        %v1148 = vadd.f32 %v1008, %v1147
        %v1149 = vpop.f32.mrb[0].mxu0
        %1150 = vmatprep.mubr.f32.mxu0 0.0
        %1151 = vmatmul.mubr.f32.gmra.mrb[0].mxu0 %v1026
        %v1152 = vpop.f32.mrb[0].mxu0
        %v1153 = vadd.f32 %v1008, %v1152
        %v1154 = vpop.f32.mrb[0].mxu0
        %1155 = vmatprep.mubr.f32.mxu0 0.0
        %1156 = vmatmul.mubr.f32.gmra.mrb[0].mxu0 %v1029
        %v1157 = vpop.f32.mrb[0].mxu0
        %v1158 = vadd.f32 %v1008, %v1157
        %v1159 = vpop.f32.mrb[0].mxu0
        %1160 = vmatprep.mubr.f32.mxu0 0.0
        %1161 = vmatmul.mubr.f32.gmra.mrb[0].mxu0 %v1032
        %v1162 = vpop.f32.mrb[0].mxu0
        %v1163 = vadd.f32 %v1008, %v1162
        %v1164 = vpop.f32.mrb[0].mxu0
        %1165 = vmatprep.mubr.f32.mxu0 0.0
        %1166 = vmatmul.mubr.f32.gmra.mrb[0].mxu0 %v1035
        %v1167 = vpop.f32.mrb[0].mxu0
        %v1168 = vadd.f32 %v1008, %v1167
        %v1169 = vpop.f32.mrb[0].mxu0
        %1170 = vmatprep.mubr.f32.mxu0 0.0
        %1171 = vmatmul.mubr.f32.gmra.mrb[0].mxu0 %v1038
        %v1172 = vpop.f32.mrb[0].mxu0
        %v1173 = vadd.f32 %v1008, %v1172
        %v1174 = vpop.f32.mrb[0].mxu0
        %1175 = vmatprep.mubr.f32.mxu0 0.0
        %1176 = vmatmul.mubr.f32.gmra.mrb[0].mxu0 %v1041
        %v1177 = vpop.f32.mrb[0].mxu0
        %v1178 = vadd.f32 %v1008, %v1177
        %v1179 = vpop.f32.mrb[0].mxu0
        %1180 = vmatprep.mubr.f32.mxu0 0.0
        %1181 = vmatmul.mubr.f32.gmra.mrb[0].mxu0 %v1044
        %v1182 = vpop.f32.mrb[0].mxu0
        %v1183 = vadd.f32 %v1008, %v1182
        %v1184 = vpop.f32.mrb[0].mxu0
        %1185 = vmatprep.mubr.f32.mxu0 0.0
        %1186 = vmatmul.mubr.f32.gmra.mrb[0].mxu0 %v1047
        %v1187 = vpop.f32.mrb[0].mxu0
        %v1188 = vadd.f32 %v1008, %v1187
        %v1189 = vpop.f32.mrb[0].mxu0
        %1190 = vmatprep.mubr.f32.mxu0 0.0
        %1191 = vmatmul.mubr.f32.gmra.mrb[0].mxu0 %v1050
        %v1192 = vpop.f32.mrb[0].mxu0
        %v1193 = vadd.f32 %v1008, %v1192
        %v1194 = vpop.f32.mrb[0].mxu0
        %1195 = vmatprep.mubr.f32.mxu0 0.0
        %1196 = vmatmul.mubr.f32.gmra.mrb[0].mxu0 %v1053
        %v1197 = vpop.f32.mrb[0].mxu0
        %v1198 = vadd.f32 %v1008, %v1197
        %v1199 = vpop.f32.mrb[0].mxu0
        %1200 = vmatprep.mubr.f32.mxu0 0.0
        %1201 = vmatmul.mubr.f32.gmra.mrb[0].mxu0 %v1056
        %v1202 = vpop.f32.mrb[0].mxu0
        %v1203 = vadd.f32 %v1008, %v1202
        %v1204 = vpop.f32.mrb[0].mxu0
        %1205 = vdwg.mxu0
        %vm1206 = vcmask 31744
        %1207 = vst.msk [vmem:[%s497] sm:$0xff] %vm1206, %v1128
        %1208 = vst.msk [vmem:[%s497 + $0x8] sm:$0xff] %vm1206, %v1133
        %1209 = vst.msk [vmem:[%s497 + $0x10] sm:$0xff] %vm1206, %v1138
        %1210 = vst.msk [vmem:[%s497 + $0x18] sm:$0xff] %vm1206, %v1143
        %1211 = vst.msk [vmem:[%s497 + $0x20] sm:$0xff] %vm1206, %v1148
        %1212 = vst.msk [vmem:[%s497 + $0x28] sm:$0xff] %vm1206, %v1153
        %1213 = vst.msk [vmem:[%s497 + $0x30] sm:$0xff] %vm1206, %v1158
        %1214 = vst.msk [vmem:[%s497 + $0x38] sm:$0xff] %vm1206, %v1163
        %1215 = vst.msk [vmem:[%s497 + $0x40] sm:$0xff] %vm1206, %v1168
        %1216 = vst.msk [vmem:[%s497 + $0x48] sm:$0xff] %vm1206, %v1173
        %1217 = vst.msk [vmem:[%s497 + $0x50] sm:$0xff] %vm1206, %v1178
        %1218 = vst.msk [vmem:[%s497 + $0x58] sm:$0xff] %vm1206, %v1183
        %1219 = vst.msk [vmem:[%s497 + $0x60] sm:$0xff] %vm1206, %v1188
        %1220 = vst.msk [vmem:[%s497 + $0x68] sm:$0xff] %vm1206, %v1193
        %1221 = vst.msk [vmem:[%s497 + $0x70] sm:$0xff] %vm1206, %v1198
        %1222 = vst.msk [vmem:[%s497 + $0x78] sm:$0xff] %vm1206, %v1203
        %v1223 = vlaneseq
        %v1224 = vshrl.u32 %v1223, 7
        %vm1225 = vcmask 1043456
        %v1226 = vsel %vm1225, %v903, -inf
        %v1227 = vrot.slane %v1226, 4
        %v1228 = vmax.f32 %v1226, %v1227
        %v1229 = vrot.slane %v1228, 2
        %v1230 = vmax.f32 %v1228, %v1229
        %v1231 = vrot.slane %v1230, 1
        %v1232 = vmax.f32 %v1230, %v1231
        %vm1233 = vcmp.eq.f32.partialorder %v903, %v1232
        %v1234 = vsel %vm1233, %v1224, 4
        %v1235 = vsel %vm1225, %v1234, 2147483647
        %v1236 = vrot.slane %v1235, 4
        %vm1237 = vcmp.lt.s32.totalorder %v1235, %v1236
        %v1238 = vsel %vm1237, %v1235, %v1236
        %v1239 = vrot.slane %v1238, 2
        %vm1240 = vcmp.lt.s32.totalorder %v1238, %v1239
        %v1241 = vsel %vm1240, %v1238, %v1239
        %v1242 = vrot.slane %v1241, 1
        %vm1243 = vcmp.lt.s32.totalorder %v1241, %v1242
        %v1244 = vsel %vm1243, %v1241, %v1242
        %1245 = vst [vmem:[%s466] sm:$0x1] %v1244
        %v1246 = vld [vmem:[%s480] sm:$0x1]
        %vm1247 = vcmp.ne.s32.totalorder %v1246, 4294967295
        %v1248 = vsel %vm1247, %v1246, 0
        %v1249 = vsub.f32 %v903, %v1232
        %v1250 = vmul.f32 %v1249, 1.442695
        %v1251 = vpow.pop %v1250
        %v1252 = vsel %vm1225, %v1251, 0.0
        %v1253 = vrot.slane %v1252, 4
        %v1254 = vadd.f32 %v1252, %v1253
        %v1255 = vrot.slane %v1254, 2
        %v1256 = vadd.f32 %v1254, %v1255
        %v1257 = vrot.slane %v1256, 1
        %v1258 = vadd.f32 %v1256, %v1257
        %v1259 = vlog2.pop %v1258
        %v1260 = vmul.f32 %v1259, 0.6931472
        %v1261 = vadd.f32 %v1232, %v1260
        %v1262 = vlaneseq
        %v1263 = vshrl.u32 %v1262, 7
        %v1264 = vsub.s32 0, %v1263
        %v1265 = vrot.slane %v1248, %v1264
        %vm1266 = vcmp.eq.s32.totalorder %v1224, %v1265
        %v1267 = vsel %vm1266, %v903, 0.0
        %v1268 = vsel %vm1225, %v1267, 0.0
        %v1269 = vrot.slane %v1268, 4
        %v1270 = vadd.f32 %v1268, %v1269
        %v1271 = vrot.slane %v1270, 2
        %v1272 = vadd.f32 %v1270, %v1271
        %v1273 = vrot.slane %v1272, 1
        %v1274 = vadd.f32 %v1272, %v1273
        %v1275 = vsub.f32 %v1261, %v1274
        %v1276 = vsel %vm1247, %v1275, 0.0
        %1277 = vst [vmem:[%s501] sm:$0x1] %v1276
        %s1278 = smul.u32 16, %s28
        %p1279 = scmp.lt.s32.totalorder %s1278, 31
        %s1280 = scalar_select %p1279, %s1278, 31
        %s1281 = smul.addr %s1280, 8
        %s1282 = scalar_lea.vmem %s9, %s1281
        %s1283 = smul.u32 16, %s28
        %p1284 = scmp.lt.s32.totalorder %s1283, 31
        %s1285 = scalar_select %p1284, %s1283, 31
        %s1286 = smul.addr %s1285, 8
        %s1287 = scalar_lea.vmem %s10, %s1286
        %s1288 = smul.u32 16, %s28
        %p1289 = scmp.lt.s32.totalorder %s1288, 31
        %s1290 = scalar_select %p1289, %s1288, 31
        %s1291 = smul.addr %s1290, 8
        %s1292 = scalar_lea.vmem %s11, %s1291
        %s1293 = sand.u32 %s313, 1
        %s1294 = scalar_lea.sflag [#allocation3], %s1293
        %s1295 = sand.u32 %s313, 1
        %s1296 = scalar_lea.vmem [#allocation2], %s1295
        %p1297 = scmp.lt.s32.totalorder %s28, 1
        %s1298 = scalar_select %p1297, %s28, 1
        %s1299 = scalar_lea.vmem %s13, %s1298
        // Predicated region
        $region57: #{graphlet_dnn_forward.1} parent=55 // pred_check
          %p1300 = pneg %p245
        $region58: #{graphlet_dnn_forward.1} parent=55 // pred_check_branch
          %1302 = sbr.rel (%p1300) target = $region60
        $region59: #{graphlet_dnn_forward.1} parent=55 // pred_region
          %s1303 = smul.u32 16, %s28
        $region60: #{graphlet_dnn_forward.1} parent=55 // pred_fallthru
          _
        // Predicated region
        $region61: #{graphlet_dnn_forward.1} parent=55 // pred_check
          %p1304 = pneg %p271
        $region62: #{graphlet_dnn_forward.1} parent=55 // pred_check_branch
          %1306 = sbr.rel (%p1304) target = $region64
        $region63: #{graphlet_dnn_forward.1} parent=55 // pred_region
          %s1307 = smul.u32 16, %s28
        $region64: #{graphlet_dnn_forward.1} parent=55 // pred_fallthru
          _
        // Predicated region
        $region65: #{graphlet_dnn_forward.1} parent=55 // pred_check
          %p1308 = pneg %p297
        $region66: #{graphlet_dnn_forward.1} parent=55 // pred_check_branch
          %1310 = sbr.rel (%p1308) target = $region68
        $region67: #{graphlet_dnn_forward.1} parent=55 // pred_region
          %s1311 = smul.u32 16, %s28
        $region68: #{graphlet_dnn_forward.1} parent=55 // pred_fallthru
          _
        // Predicated region
        $region69: #{graphlet_dnn_forward.1} parent=55 // pred_check
          %p1312 = pneg %p323
        $region70: #{graphlet_dnn_forward.1} parent=55 // pred_check_branch
          %1314 = sbr.rel (%p1312) target = $region72
        $region71: #{graphlet_dnn_forward.1} parent=55 // pred_region
          %s1316 = ssub.s32 16, 16
          %1317 = vsyncadd %s1294, %s1316
          %s1318 = smul.addr %s28, 16
          %s1319 = scalar_lea.hbm %s12, %s1318
          %s1321 = sshll.u32 %s1296, 4
          %s1322 = int_to_ptr.vmem [resolvable:$true] %s1321
          %1324 = dma.vmem_to_hbm [thread:$0]  %s1322, 16, %s1319, %s1294
        $region72: #{graphlet_dnn_forward.1} parent=55 // pred_fallthru
          _
        // Predicated region
        $region73: #{graphlet_dnn_forward.1} parent=55 // pred_check
          %p1325 = pneg %p349
        $region74: #{graphlet_dnn_forward.1} parent=55 // pred_check_branch
          %1327 = sbr.rel (%p1325) target = $region76
        $region75: #{graphlet_dnn_forward.1} parent=55 // pred_region
          _
        $region76: #{graphlet_dnn_forward.1} parent=55 // pred_fallthru
          _
      $region56: #{graphlet_dnn_forward.1} parent=5 // pred_fallthru
        _
      %p1328 = scmp.le.s32.totalorder 2, %s23
      // Predicated region
      $region77: #{graphlet_dnn_forward.1} parent=5 // pred_check
        %p1329 = pneg %p1328
      $region78: #{graphlet_dnn_forward.1} parent=5 // pred_check_branch
        %1331 = sbr.rel (%p1329) target = $region80
      $region79: #{graphlet_dnn_forward.1} parent=5 // pred_region
        %s1332 = ssub.s32 %s23, 2
        // Predicated region
        $region81: #{graphlet_dnn_forward.1} parent=79 // pred_check
          %p1333 = pneg %p251
        $region82: #{graphlet_dnn_forward.1} parent=79 // pred_check_branch
          %1335 = sbr.rel (%p1333) target = $region84
        $region83: #{graphlet_dnn_forward.1} parent=79 // pred_region
          %s1336 = smul.u32 16, %s29
          %p1337 = scmp.lt.s32.totalorder %s1336, 31
          %s1338 = scalar_select %p1337, %s1336, 31
          %s1339 = smul.addr %s1338, 8
          %s1340 = scalar_lea.vmem %s9, %s1339
        $region84: #{graphlet_dnn_forward.1} parent=79 // pred_fallthru
          _
        // Predicated region
        $region85: #{graphlet_dnn_forward.1} parent=79 // pred_check
          %p1341 = pneg %p277
        $region86: #{graphlet_dnn_forward.1} parent=79 // pred_check_branch
          %1343 = sbr.rel (%p1341) target = $region88
        $region87: #{graphlet_dnn_forward.1} parent=79 // pred_region
          %s1344 = smul.u32 16, %s29
          %p1345 = scmp.lt.s32.totalorder %s1344, 31
          %s1346 = scalar_select %p1345, %s1344, 31
          %s1347 = smul.addr %s1346, 8
          %s1348 = scalar_lea.vmem %s10, %s1347
        $region88: #{graphlet_dnn_forward.1} parent=79 // pred_fallthru
          _
        // Predicated region
        $region89: #{graphlet_dnn_forward.1} parent=79 // pred_check
          %p1349 = pneg %p303
        $region90: #{graphlet_dnn_forward.1} parent=79 // pred_check_branch
          %1351 = sbr.rel (%p1349) target = $region92
        $region91: #{graphlet_dnn_forward.1} parent=79 // pred_region
          %s1352 = smul.u32 16, %s29
          %p1353 = scmp.lt.s32.totalorder %s1352, 31
          %s1354 = scalar_select %p1353, %s1352, 31
          %s1355 = smul.addr %s1354, 8
          %s1356 = scalar_lea.vmem %s11, %s1355
        $region92: #{graphlet_dnn_forward.1} parent=79 // pred_fallthru
          _
        // Predicated region
        $region93: #{graphlet_dnn_forward.1} parent=79 // pred_check
          %p1357 = pneg %p329
        $region94: #{graphlet_dnn_forward.1} parent=79 // pred_check_branch
          %1359 = sbr.rel (%p1357) target = $region96
        $region95: #{graphlet_dnn_forward.1} parent=79 // pred_region
          %s1360 = sand.u32 %s314, 1
          %s1361 = scalar_lea.sflag [#allocation3], %s1360
          %s1362 = sand.u32 %s314, 1
          %s1363 = scalar_lea.vmem [#allocation2], %s1362
          %1364 = dma.done %s1361, 16
        $region96: #{graphlet_dnn_forward.1} parent=79 // pred_fallthru
          _
        // Predicated region
        $region97: #{graphlet_dnn_forward.1} parent=79 // pred_check
          %p1365 = pneg %p355
        $region98: #{graphlet_dnn_forward.1} parent=79 // pred_check_branch
          %1367 = sbr.rel (%p1365) target = $region100
        $region99: #{graphlet_dnn_forward.1} parent=79 // pred_region
          %p1368 = scmp.lt.s32.totalorder %s29, 1
          %s1369 = scalar_select %p1368, %s29, 1
          %s1370 = scalar_lea.vmem %s13, %s1369
        $region100: #{graphlet_dnn_forward.1} parent=79 // pred_fallthru
          _
      $region80: #{graphlet_dnn_forward.1} parent=5 // pred_fallthru
        _
    $region6: #{graphlet_dnn_forward.1} parent=1 // loop_footer
      %s27 = sadd.s32 1, %s23
    $region7: #{graphlet_dnn_forward.1} parent=1 // loop_footer_branch
      %22 = sbr.rel target = $region3
    $region8: #{graphlet_dnn_forward.1} parent=1 // loop_exit
      _
    %1371 = vsyncpa [#allocation3], 1
    %s1372 = scalar_lea.sflag [#allocation3], 1
    %1373 = vsyncpa %s1372, 1

</llo_original>
